<compile_context>
chip_gen: v6e
topology: v6e:2x2x1
jax: 0.10.0
libtpu: 0.0.40
codegen_flags: <defaults>
</compile_context>

<pallas_src>
import functools

import jax
import jax.numpy as jnp
from jax.experimental import pallas as pl
from jax.experimental.pallas import tpu as pltpu


# ----------------------------------------------------------------------------
# Fused Pallas kernel (TILE_N samples per grid step, everything in VMEM/vregs)
# ----------------------------------------------------------------------------
def _causal_conv(h, w_taps, b, *, dilation, relu, compute_dtype):
    """Causal dilated Conv1d on (TILE_N, L, C_in) -> (TILE_N, L, C_out).

    Equivalent to PyTorch Conv1d(padding=(K-1)*d, dilation=d) + Chomp1d.
    Taps are built in registers (zero top-pad + static slices); each tap is a
    (TILE_N*L, C_in) @ (C_in, C_out) MXU matmul accumulated in float32.
    """
    TILE_N, L, C_in = h.shape
    K = w_taps.shape[0]
    C_out = w_taps.shape[-1]
    M = TILE_N * L
    P = (K - 1) * dilation
    if P > 0:
        hp = jnp.concatenate(
            [jnp.zeros((TILE_N, P, C_in), h.dtype), h], axis=1)
    else:
        hp = h
    acc = jnp.zeros((M, C_out), jnp.float32)
    for k in range(K):                         # static, fully unrolled (K=2..3)
        if (K - 1 - k) * dilation >= L:        # tap lies entirely in the pad
            continue
        tap = hp[:, k * dilation:k * dilation + L, :]
        acc = acc + jnp.dot(tap.reshape(M, C_in), w_taps[k],
                            preferred_element_type=jnp.float32)
    y = acc + b
    if relu:
        y = jnp.maximum(y, 0.0)
    return y.reshape(TILE_N, L, C_out).astype(compute_dtype)


def _tcn_fused_kernel(*refs, cfgs, L, compute_dtype):
    # refs = (x_ref, <per-block weights...>, lin_w, lin_b, out_ref)
    x_ref = refs[0]
    out_ref = refs[-1]
    w_refs = refs[1:-1]

    h = x_ref[...].astype(compute_dtype)       # (TILE_N, L, C_in)
    i = 0
    for cfg in cfgs:                           # static unrolled block stack
        d = cfg["dilation"]
        w1, b1 = w_refs[i][...], w_refs[i + 1][...]
        w2, b2 = w_refs[i + 2][...], w_refs[i + 3][...]
        i += 4
        h1 = _causal_conv(h, w1, b1, dilation=d, relu=True,
                          compute_dtype=compute_dtype)
        h2 = _causal_conv(h1, w2, b2, dilation=d, relu=True,
                          compute_dtype=compute_dtype)
        if cfg["down"]:                        # 1x1 downsample conv
            wd, bd = w_refs[i][...], w_refs[i + 1][...]
            i += 2
            tn, _, c_in = h.shape
            res = (jnp.dot(h.reshape(tn * L, c_in), wd,
                           preferred_element_type=jnp.float32)
                   + bd).reshape(tn, L, -1).astype(compute_dtype)
        else:
            res = h
        h = jnp.maximum(h2 + res, 0.0)         # TemporalBlock output (post-ReLU)

    # Head: y1 = relu(tcn(x)); out = linear(y1[:, :, -1]).
    # h is already post-ReLU, so relu(relu(.)) = relu(.) -- no extra max needed.
    lin_w, lin_b = w_refs[i][...], w_refs[i + 1][...]
    last = h[:, L - 1, :]                      # (TILE_N, C_last), in-register
    y = jnp.dot(last, lin_w, preferred_element_type=jnp.float32) + lin_b
    out_ref[...] = y[None].astype(out_ref.dtype)


# ----------------------------------------------------------------------------
# One-time parameter preparation (hoists all transposes / reshapes)
# ----------------------------------------------------------------------------
def prepare_pallas_params(params, dtype=jnp.float32):
    """dtype=jnp.bfloat16 recommended on v6e/v7x (f32 accumulation is kept)."""
    flat, cfgs = [], []
    K = int(params["blocks"][0]["w1"].shape[-1])
    for blk in params["blocks"]:
        c_out, c_in, _ = blk["w1"].shape
        # (C_out, C_in, K) -> (K, C_in, C_out): tap-major stack, MXU-ready
        w1 = jnp.transpose(blk["w1"], (2, 1, 0)).astype(dtype)
        w2 = jnp.transpose(blk["w2"], (2, 1, 0)).astype(dtype)
        flat += [w1, blk["b1"].reshape(1, c_out).astype(dtype),
                 w2, blk["b2"].reshape(1, c_out).astype(dtype)]
        down = blk["wd"] is not None
        if down:
            flat += [blk["wd"][:, :, 0].T.astype(dtype),
                     blk["bd"].reshape(1, c_out).astype(dtype)]
        cfgs.append({"dilation": int(blk["dilation"]), "down": down,
                     "c_in": int(c_in), "c_out": int(c_out)})
    flat += [params["lin_w"].T.astype(dtype),
             params["lin_b"].reshape(1, -1).astype(dtype)]
    return {"flat": tuple(flat), "cfgs": tuple(cfgs), "K": K,
            "O": int(params["lin_w"].shape[0]), "dtype": dtype}


# ----------------------------------------------------------------------------
# Pallas forward wrapper (single pallas_call, batch-tiled grid)
# ----------------------------------------------------------------------------
def tcn_forward(x, pp, *, x_layout="NCL", tile_n=None):
    """x: PyTorch-layout (N, C_in, L) by default; pass x_layout='NLC' to skip
    the wrapper transpose when the producer already emits channels-last."""
    if x_layout == "NCL":
        x_nlc = jnp.transpose(x, (0, 2, 1))    # layout glue -> (N, L, C)
    else:
        x_nlc = x
    N, L, C_in = x_nlc.shape
    O, K = pp["O"], pp["K"]
    flat = pp["flat"]

    # Pick TILE_N so the folded matmul M = TILE_N*L approaches 128 while
    # keeping >= 2 grid programs (v7x has 2 TensorCores).
    if tile_n is None:
        tile_n = max(1, min(N, max(1, 128 // max(L, 1)), 8))
        while tile_n > 1 and pl.cdiv(N, tile_n) < 2:
            tile_n //= 2
    G = pl.cdiv(N, tile_n)
    N_pad = G * tile_n
    if N_pad != N:
        x_nlc = jnp.pad(x_nlc, ((0, N_pad - N), (0, 0), (0, 0)))

    kernel = functools.partial(_tcn_fused_kernel, cfgs=pp["cfgs"], L=L,
                               compute_dtype=pp["dtype"])

    in_specs = [pl.BlockSpec((tile_n, L, C_in), lambda g: (g, 0, 0))]
    for w in flat:                              # resident full-array blocks
        in_specs.append(pl.BlockSpec(w.shape, lambda g, r=w.ndim: (0,) * r))
    # TODO(synk): pack all constant weights into one 128-lane-padded buffer
    # (single DMA stream / single buffer) for large-channel configs.

    # Advisory cost estimate for XLA's scheduler.
    flops_per_sample = 0
    for cfg in pp["cfgs"]:
        ci, co = cfg["c_in"], cfg["c_out"]
        flops_per_sample += 2 * L * K * ci * co + 2 * L * K * co * co
        if cfg["down"]:
            flops_per_sample += 2 * L * ci * co
    flops_per_sample += 2 * pp["cfgs"][-1]["c_out"] * O
    bytes_accessed = (x_nlc.size * x_nlc.dtype.itemsize
                      + sum(int(w.size) * w.dtype.itemsize for w in flat)
                      + N_pad * O * jnp.dtype(x.dtype).itemsize)

    out = pl.pallas_call(
        kernel,
        out_shape=jax.ShapeDtypeStruct((G, tile_n, O), x.dtype),
        grid=(G,),
        in_specs=in_specs,
        out_specs=pl.BlockSpec((1, tile_n, O), lambda g: (g, 0, 0)),
        compiler_params=pltpu.CompilerParams(
            dimension_semantics=("parallel",)),
        cost_estimate=pl.CostEstimate(flops=int(flops_per_sample) * int(N_pad),
                                      transcendentals=0,
                                      bytes_accessed=int(bytes_accessed)),
    )(x_nlc, *flat)
    return out.reshape(N_pad, O)[:N]


# ----------------------------------------------------------------------------
# Pure-JAX reference (independent path via lax.conv_general_dilated)
# ----------------------------------------------------------------------------
def _ref_conv(x_ncl, w_oik, b, dilation):
    K = w_oik.shape[-1]
    P = (K - 1) * dilation
    y = jax.lax.conv_general_dilated(
        x_ncl, w_oik, window_strides=(1,), padding=[(P, 0)],
        rhs_dilation=(dilation,), dimension_numbers=('NCH', 'OIH', 'NCH'))
    return y + b[None, :, None]


def ref_forward(x_ncl, params):
    h = x_ncl
    for blk in params['blocks']:
        d = blk['dilation']
        h1 = jnp.maximum(_ref_conv(h, blk['w1'], blk['b1'], d), 0.0)
        h2 = jnp.maximum(_ref_conv(h1, blk['w2'], blk['b2'], d), 0.0)
        res = h if blk['wd'] is None else _ref_conv(h, blk['wd'], blk['bd'], 1)
        h = jnp.maximum(h2 + res, 0.0)
    y1 = jnp.maximum(h, 0.0)
    return y1[:, :, -1] @ params['lin_w'].T + params['lin_b']


# ----------------------------------------------------------------------------
# Deterministic synthetic parameters (shapes follow the module's __init__)
# ----------------------------------------------------------------------------
def init_tcn_params(key, input_size, output_size, num_channels, kernel_size):
    params = {'blocks': []}
    in_c = input_size
    for i, out_c in enumerate(num_channels):
        key, k1, k2, k3 = jax.random.split(key, 4)
        blk = {
            'dilation': 2 ** i,
            'w1': 0.3 * jax.random.normal(k1, (out_c, in_c, kernel_size),
                                          jnp.float32),
            'b1': jnp.full((out_c,), 0.01, jnp.float32),
            'w2': 0.3 * jax.random.normal(k2, (out_c, out_c, kernel_size),
                                          jnp.float32),
            'b2': jnp.full((out_c,), 0.01, jnp.float32),
        }
        if in_c != out_c:
            blk['wd'] = 0.3 * jax.random.normal(k3, (out_c, in_c, 1),
                                                jnp.float32)
            blk['bd'] = jnp.full((out_c,), 0.01, jnp.float32)
        else:
            blk['wd'] = None
            blk['bd'] = None
        params['blocks'].append(blk)
        in_c = out_c
    key, kl = jax.random.split(key)
    params['lin_w'] = 0.3 * jax.random.normal(
        kl, (output_size, num_channels[-1]), jnp.float32)
    params['lin_b'] = jnp.full((output_size,), 0.01, jnp.float32)
    return params


if __name__ == "__main__":
    key = jax.random.PRNGKey(0)
    N, C_in, L = 2, 4, 16          # batch, input_size, sequence length
    num_channels = [8, 8]          # two blocks (with & without downsample)
    kernel_size = 2
    output_size = 5
    # dropout = 0.0  (inference: dropout layers are identity)

    key, kx = jax.random.split(key)
    x = jax.random.normal(kx, (N, C_in, L), jnp.float32)   # PyTorch (N, C, L)
    params = init_tcn_params(key, C_in, output_size, num_channels, kernel_size)
    pparams = prepare_pallas_params(params)                # one-time prep (f32)

    out = tcn_forward(x, pparams)
    out = jax.block_until_ready(out)

    ref = ref_forward(x, params)
    assert out.shape == (N, output_size)
    assert jnp.allclose(out, ref, atol=1e-4, rtol=1e-4), (out, ref)
    print("KERNEL_OK")
</pallas_src>

<mosaic_0001>
module attributes {stable_mosaic.version = 11 : i64} {
  func.func @_tcn_fused_kernel(%arg0: i32, %arg1: memref<1x16x4xf32, #tpu.memory_space<vmem>>, %arg2: memref<2x4x8xf32, #tpu.memory_space<vmem>>, %arg3: memref<1x8xf32, #tpu.memory_space<vmem>>, %arg4: memref<2x8x8xf32, #tpu.memory_space<vmem>>, %arg5: memref<1x8xf32, #tpu.memory_space<vmem>>, %arg6: memref<4x8xf32, #tpu.memory_space<vmem>>, %arg7: memref<1x8xf32, #tpu.memory_space<vmem>>, %arg8: memref<2x8x8xf32, #tpu.memory_space<vmem>>, %arg9: memref<1x8xf32, #tpu.memory_space<vmem>>, %arg10: memref<2x8x8xf32, #tpu.memory_space<vmem>>, %arg11: memref<1x8xf32, #tpu.memory_space<vmem>>, %arg12: memref<8x5xf32, #tpu.memory_space<vmem>>, %arg13: memref<1x5xf32, #tpu.memory_space<vmem>>, %arg14: memref<1x1x5xf32, #tpu.memory_space<vmem>>) attributes {dimension_semantics = [#tpu.dimension_semantics<parallel>], iteration_bounds = array<i64: 2>, scalar_prefetch = 0 : i64, scratch_operands = 0 : i64, tpu.core_type = #tpu.core_type<tc>, window_params = [{transform_indices = @transform_0, window_bounds = array<i64: 1, 16, 4>}, {pipeline_mode = #tpu.pipeline_mode<synchronous>, transform_indices = @transform_1, window_bounds = array<i64: 2, 4, 8>}, {pipeline_mode = #tpu.pipeline_mode<synchronous>, transform_indices = @transform_2, window_bounds = array<i64: 1, 8>}, {pipeline_mode = #tpu.pipeline_mode<synchronous>, transform_indices = @transform_3, window_bounds = array<i64: 2, 8, 8>}, {pipeline_mode = #tpu.pipeline_mode<synchronous>, transform_indices = @transform_4, window_bounds = array<i64: 1, 8>}, {pipeline_mode = #tpu.pipeline_mode<synchronous>, transform_indices = @transform_5, window_bounds = array<i64: 4, 8>}, {pipeline_mode = #tpu.pipeline_mode<synchronous>, transform_indices = @transform_6, window_bounds = array<i64: 1, 8>}, {pipeline_mode = #tpu.pipeline_mode<synchronous>, transform_indices = @transform_7, window_bounds = array<i64: 2, 8, 8>}, {pipeline_mode = #tpu.pipeline_mode<synchronous>, transform_indices = @transform_8, window_bounds = array<i64: 1, 8>}, {pipeline_mode = #tpu.pipeline_mode<synchronous>, transform_indices = @transform_9, window_bounds = array<i64: 2, 8, 8>}, {pipeline_mode = #tpu.pipeline_mode<synchronous>, transform_indices = @transform_10, window_bounds = array<i64: 1, 8>}, {pipeline_mode = #tpu.pipeline_mode<synchronous>, transform_indices = @transform_11, window_bounds = array<i64: 8, 5>}, {pipeline_mode = #tpu.pipeline_mode<synchronous>, transform_indices = @transform_12, window_bounds = array<i64: 1, 5>}, {transform_indices = @transform_13, window_bounds = array<i64: 1, 1, 5>}]} {
    %c0 = arith.constant 0 : index
    %c0_0 = arith.constant 0 : index
    %c0_1 = arith.constant 0 : index
    %0 = vector.load %arg1[%c0, %c0_0, %c0_1] : memref<1x16x4xf32, #tpu.memory_space<vmem>>, vector<1x16x4xf32>
    %c0_2 = arith.constant 0 : index
    %c0_3 = arith.constant 0 : index
    %c0_4 = arith.constant 0 : index
    %1 = vector.load %arg2[%c0_2, %c0_3, %c0_4] : memref<2x4x8xf32, #tpu.memory_space<vmem>>, vector<2x4x8xf32>
    %c0_5 = arith.constant 0 : index
    %c0_6 = arith.constant 0 : index
    %2 = vector.load %arg3[%c0_5, %c0_6] : memref<1x8xf32, #tpu.memory_space<vmem>>, vector<1x8xf32>
    %c0_7 = arith.constant 0 : index
    %c0_8 = arith.constant 0 : index
    %c0_9 = arith.constant 0 : index
    %3 = vector.load %arg4[%c0_7, %c0_8, %c0_9] : memref<2x8x8xf32, #tpu.memory_space<vmem>>, vector<2x8x8xf32>
    %c0_10 = arith.constant 0 : index
    %c0_11 = arith.constant 0 : index
    %4 = vector.load %arg5[%c0_10, %c0_11] : memref<1x8xf32, #tpu.memory_space<vmem>>, vector<1x8xf32>
    %cst = arith.constant 0.000000e+00 : f32
    %5 = vector.broadcast %cst : f32 to vector<1x1x4xf32>
    %6 = tpu.concatenate %5, %0 in 1 : vector<1x1x4xf32>, vector<1x16x4xf32> -> vector<1x17x4xf32>
    %cst_12 = arith.constant 0.000000e+00 : f32
    %7 = vector.broadcast %cst_12 : f32 to vector<16x8xf32>
    %8 = vector.extract_strided_slice %6 {offsets = [0, 0, 0], sizes = [1, 16, 4], strides = [1, 1, 1]} : vector<1x17x4xf32> to vector<1x16x4xf32>
    %9 = vector.shape_cast %8 : vector<1x16x4xf32> to vector<16x4xf32>
    %10 = vector.extract_strided_slice %1 {offsets = [0, 0, 0], sizes = [1, 4, 8], strides = [1, 1, 1]} : vector<2x4x8xf32> to vector<1x4x8xf32>
    %11 = vector.shape_cast %10 : vector<1x4x8xf32> to vector<4x8xf32>
    %cst_13 = arith.constant dense<0.000000e+00> : vector<16x8xf32>
    %12 = tpu.matmul %9, %11, %cst_13 {dimension_numbers = #tpu.dot_dimension_numbers<[1], [0], [0], [1], [0, 0, 1, 1], [], []>} : vector<16x4xf32>, vector<4x8xf32>, vector<16x8xf32> -> vector<16x8xf32>
    %13 = arith.addf %7, %12 : vector<16x8xf32>
    %14 = vector.extract_strided_slice %6 {offsets = [0, 1, 0], sizes = [1, 16, 4], strides = [1, 1, 1]} : vector<1x17x4xf32> to vector<1x16x4xf32>
    %15 = vector.shape_cast %14 : vector<1x16x4xf32> to vector<16x4xf32>
    %16 = vector.extract_strided_slice %1 {offsets = [1, 0, 0], sizes = [1, 4, 8], strides = [1, 1, 1]} : vector<2x4x8xf32> to vector<1x4x8xf32>
    %17 = vector.shape_cast %16 : vector<1x4x8xf32> to vector<4x8xf32>
    %cst_14 = arith.constant dense<0.000000e+00> : vector<16x8xf32>
    %18 = tpu.matmul %15, %17, %cst_14 {dimension_numbers = #tpu.dot_dimension_numbers<[1], [0], [0], [1], [0, 0, 1, 1], [], []>} : vector<16x4xf32>, vector<4x8xf32>, vector<16x8xf32> -> vector<16x8xf32>
    %19 = arith.addf %13, %18 : vector<16x8xf32>
    %20 = vector.broadcast %2 : vector<1x8xf32> to vector<16x8xf32>
    %21 = arith.addf %19, %20 : vector<16x8xf32>
    %cst_15 = arith.constant 0.000000e+00 : f32
    %22 = vector.broadcast %cst_15 : f32 to vector<16x8xf32>
    %23 = arith.maximumf %21, %22 : vector<16x8xf32>
    %24 = vector.shape_cast %23 : vector<16x8xf32> to vector<1x16x8xf32>
    %cst_16 = arith.constant 0.000000e+00 : f32
    %25 = vector.broadcast %cst_16 : f32 to vector<1x1x8xf32>
    %26 = tpu.concatenate %25, %24 in 1 : vector<1x1x8xf32>, vector<1x16x8xf32> -> vector<1x17x8xf32>
    %cst_17 = arith.constant 0.000000e+00 : f32
    %27 = vector.broadcast %cst_17 : f32 to vector<16x8xf32>
    %28 = vector.extract_strided_slice %26 {offsets = [0, 0, 0], sizes = [1, 16, 8], strides = [1, 1, 1]} : vector<1x17x8xf32> to vector<1x16x8xf32>
    %29 = vector.shape_cast %28 : vector<1x16x8xf32> to vector<16x8xf32>
    %30 = vector.extract_strided_slice %3 {offsets = [0, 0, 0], sizes = [1, 8, 8], strides = [1, 1, 1]} : vector<2x8x8xf32> to vector<1x8x8xf32>
    %31 = vector.shape_cast %30 : vector<1x8x8xf32> to vector<8x8xf32>
    %cst_18 = arith.constant dense<0.000000e+00> : vector<16x8xf32>
    %32 = tpu.matmul %29, %31, %cst_18 {dimension_numbers = #tpu.dot_dimension_numbers<[1], [0], [0], [1], [0, 0, 1, 1], [], []>} : vector<16x8xf32>, vector<8x8xf32>, vector<16x8xf32> -> vector<16x8xf32>
    %33 = arith.addf %27, %32 : vector<16x8xf32>
    %34 = vector.extract_strided_slice %26 {offsets = [0, 1, 0], sizes = [1, 16, 8], strides = [1, 1, 1]} : vector<1x17x8xf32> to vector<1x16x8xf32>
    %35 = vector.shape_cast %34 : vector<1x16x8xf32> to vector<16x8xf32>
    %36 = vector.extract_strided_slice %3 {offsets = [1, 0, 0], sizes = [1, 8, 8], strides = [1, 1, 1]} : vector<2x8x8xf32> to vector<1x8x8xf32>
    %37 = vector.shape_cast %36 : vector<1x8x8xf32> to vector<8x8xf32>
    %cst_19 = arith.constant dense<0.000000e+00> : vector<16x8xf32>
    %38 = tpu.matmul %35, %37, %cst_19 {dimension_numbers = #tpu.dot_dimension_numbers<[1], [0], [0], [1], [0, 0, 1, 1], [], []>} : vector<16x8xf32>, vector<8x8xf32>, vector<16x8xf32> -> vector<16x8xf32>
    %39 = arith.addf %33, %38 : vector<16x8xf32>
    %40 = vector.broadcast %4 : vector<1x8xf32> to vector<16x8xf32>
    %41 = arith.addf %39, %40 : vector<16x8xf32>
    %cst_20 = arith.constant 0.000000e+00 : f32
    %42 = vector.broadcast %cst_20 : f32 to vector<16x8xf32>
    %43 = arith.maximumf %41, %42 : vector<16x8xf32>
    %44 = vector.shape_cast %43 : vector<16x8xf32> to vector<1x16x8xf32>
    %c0_21 = arith.constant 0 : index
    %c0_22 = arith.constant 0 : index
    %45 = vector.load %arg6[%c0_21, %c0_22] : memref<4x8xf32, #tpu.memory_space<vmem>>, vector<4x8xf32>
    %c0_23 = arith.constant 0 : index
    %c0_24 = arith.constant 0 : index
    %46 = vector.load %arg7[%c0_23, %c0_24] : memref<1x8xf32, #tpu.memory_space<vmem>>, vector<1x8xf32>
    %47 = vector.shape_cast %0 : vector<1x16x4xf32> to vector<16x4xf32>
    %cst_25 = arith.constant dense<0.000000e+00> : vector<16x8xf32>
    %48 = tpu.matmul %47, %45, %cst_25 {dimension_numbers = #tpu.dot_dimension_numbers<[1], [0], [0], [1], [0, 0, 1, 1], [], []>} : vector<16x4xf32>, vector<4x8xf32>, vector<16x8xf32> -> vector<16x8xf32>
    %49 = vector.broadcast %46 : vector<1x8xf32> to vector<16x8xf32>
    %50 = arith.addf %48, %49 : vector<16x8xf32>
    %51 = vector.shape_cast %50 : vector<16x8xf32> to vector<1x16x8xf32>
    %52 = arith.addf %44, %51 : vector<1x16x8xf32>
    %cst_26 = arith.constant 0.000000e+00 : f32
    %53 = vector.broadcast %cst_26 : f32 to vector<1x16x8xf32>
    %54 = arith.maximumf %52, %53 : vector<1x16x8xf32>
    %c0_27 = arith.constant 0 : index
    %c0_28 = arith.constant 0 : index
    %c0_29 = arith.constant 0 : index
    %55 = vector.load %arg8[%c0_27, %c0_28, %c0_29] : memref<2x8x8xf32, #tpu.memory_space<vmem>>, vector<2x8x8xf32>
    %c0_30 = arith.constant 0 : index
    %c0_31 = arith.constant 0 : index
    %56 = vector.load %arg9[%c0_30, %c0_31] : memref<1x8xf32, #tpu.memory_space<vmem>>, vector<1x8xf32>
    %c0_32 = arith.constant 0 : index
    %c0_33 = arith.constant 0 : index
    %c0_34 = arith.constant 0 : index
    %57 = vector.load %arg10[%c0_32, %c0_33, %c0_34] : memref<2x8x8xf32, #tpu.memory_space<vmem>>, vector<2x8x8xf32>
    %c0_35 = arith.constant 0 : index
    %c0_36 = arith.constant 0 : index
    %58 = vector.load %arg11[%c0_35, %c0_36] : memref<1x8xf32, #tpu.memory_space<vmem>>, vector<1x8xf32>
    %cst_37 = arith.constant 0.000000e+00 : f32
    %59 = vector.broadcast %cst_37 : f32 to vector<1x2x8xf32>
    %60 = tpu.concatenate %59, %54 in 1 : vector<1x2x8xf32>, vector<1x16x8xf32> -> vector<1x18x8xf32>
    %cst_38 = arith.constant 0.000000e+00 : f32
    %61 = vector.broadcast %cst_38 : f32 to vector<16x8xf32>
    %62 = vector.extract_strided_slice %60 {offsets = [0, 0, 0], sizes = [1, 16, 8], strides = [1, 1, 1]} : vector<1x18x8xf32> to vector<1x16x8xf32>
    %63 = vector.shape_cast %62 : vector<1x16x8xf32> to vector<16x8xf32>
    %64 = vector.extract_strided_slice %55 {offsets = [0, 0, 0], sizes = [1, 8, 8], strides = [1, 1, 1]} : vector<2x8x8xf32> to vector<1x8x8xf32>
    %65 = vector.shape_cast %64 : vector<1x8x8xf32> to vector<8x8xf32>
    %cst_39 = arith.constant dense<0.000000e+00> : vector<16x8xf32>
    %66 = tpu.matmul %63, %65, %cst_39 {dimension_numbers = #tpu.dot_dimension_numbers<[1], [0], [0], [1], [0, 0, 1, 1], [], []>} : vector<16x8xf32>, vector<8x8xf32>, vector<16x8xf32> -> vector<16x8xf32>
    %67 = arith.addf %61, %66 : vector<16x8xf32>
    %68 = vector.extract_strided_slice %60 {offsets = [0, 2, 0], sizes = [1, 16, 8], strides = [1, 1, 1]} : vector<1x18x8xf32> to vector<1x16x8xf32>
    %69 = vector.shape_cast %68 : vector<1x16x8xf32> to vector<16x8xf32>
    %70 = vector.extract_strided_slice %55 {offsets = [1, 0, 0], sizes = [1, 8, 8], strides = [1, 1, 1]} : vector<2x8x8xf32> to vector<1x8x8xf32>
    %71 = vector.shape_cast %70 : vector<1x8x8xf32> to vector<8x8xf32>
    %cst_40 = arith.constant dense<0.000000e+00> : vector<16x8xf32>
    %72 = tpu.matmul %69, %71, %cst_40 {dimension_numbers = #tpu.dot_dimension_numbers<[1], [0], [0], [1], [0, 0, 1, 1], [], []>} : vector<16x8xf32>, vector<8x8xf32>, vector<16x8xf32> -> vector<16x8xf32>
    %73 = arith.addf %67, %72 : vector<16x8xf32>
    %74 = vector.broadcast %56 : vector<1x8xf32> to vector<16x8xf32>
    %75 = arith.addf %73, %74 : vector<16x8xf32>
    %cst_41 = arith.constant 0.000000e+00 : f32
    %76 = vector.broadcast %cst_41 : f32 to vector<16x8xf32>
    %77 = arith.maximumf %75, %76 : vector<16x8xf32>
    %78 = vector.shape_cast %77 : vector<16x8xf32> to vector<1x16x8xf32>
    %cst_42 = arith.constant 0.000000e+00 : f32
    %79 = vector.broadcast %cst_42 : f32 to vector<1x2x8xf32>
    %80 = tpu.concatenate %79, %78 in 1 : vector<1x2x8xf32>, vector<1x16x8xf32> -> vector<1x18x8xf32>
    %cst_43 = arith.constant 0.000000e+00 : f32
    %81 = vector.broadcast %cst_43 : f32 to vector<16x8xf32>
    %82 = vector.extract_strided_slice %80 {offsets = [0, 0, 0], sizes = [1, 16, 8], strides = [1, 1, 1]} : vector<1x18x8xf32> to vector<1x16x8xf32>
    %83 = vector.shape_cast %82 : vector<1x16x8xf32> to vector<16x8xf32>
    %84 = vector.extract_strided_slice %57 {offsets = [0, 0, 0], sizes = [1, 8, 8], strides = [1, 1, 1]} : vector<2x8x8xf32> to vector<1x8x8xf32>
    %85 = vector.shape_cast %84 : vector<1x8x8xf32> to vector<8x8xf32>
    %cst_44 = arith.constant dense<0.000000e+00> : vector<16x8xf32>
    %86 = tpu.matmul %83, %85, %cst_44 {dimension_numbers = #tpu.dot_dimension_numbers<[1], [0], [0], [1], [0, 0, 1, 1], [], []>} : vector<16x8xf32>, vector<8x8xf32>, vector<16x8xf32> -> vector<16x8xf32>
    %87 = arith.addf %81, %86 : vector<16x8xf32>
    %88 = vector.extract_strided_slice %80 {offsets = [0, 2, 0], sizes = [1, 16, 8], strides = [1, 1, 1]} : vector<1x18x8xf32> to vector<1x16x8xf32>
    %89 = vector.shape_cast %88 : vector<1x16x8xf32> to vector<16x8xf32>
    %90 = vector.extract_strided_slice %57 {offsets = [1, 0, 0], sizes = [1, 8, 8], strides = [1, 1, 1]} : vector<2x8x8xf32> to vector<1x8x8xf32>
    %91 = vector.shape_cast %90 : vector<1x8x8xf32> to vector<8x8xf32>
    %cst_45 = arith.constant dense<0.000000e+00> : vector<16x8xf32>
    %92 = tpu.matmul %89, %91, %cst_45 {dimension_numbers = #tpu.dot_dimension_numbers<[1], [0], [0], [1], [0, 0, 1, 1], [], []>} : vector<16x8xf32>, vector<8x8xf32>, vector<16x8xf32> -> vector<16x8xf32>
    %93 = arith.addf %87, %92 : vector<16x8xf32>
    %94 = vector.broadcast %58 : vector<1x8xf32> to vector<16x8xf32>
    %95 = arith.addf %93, %94 : vector<16x8xf32>
    %cst_46 = arith.constant 0.000000e+00 : f32
    %96 = vector.broadcast %cst_46 : f32 to vector<16x8xf32>
    %97 = arith.maximumf %95, %96 : vector<16x8xf32>
    %98 = vector.shape_cast %97 : vector<16x8xf32> to vector<1x16x8xf32>
    %99 = arith.addf %98, %54 : vector<1x16x8xf32>
    %cst_47 = arith.constant 0.000000e+00 : f32
    %100 = vector.broadcast %cst_47 : f32 to vector<1x16x8xf32>
    %101 = arith.maximumf %99, %100 : vector<1x16x8xf32>
    %c0_48 = arith.constant 0 : index
    %c0_49 = arith.constant 0 : index
    %102 = vector.load %arg12[%c0_48, %c0_49] : memref<8x5xf32, #tpu.memory_space<vmem>>, vector<8x5xf32>
    %c0_50 = arith.constant 0 : index
    %c0_51 = arith.constant 0 : index
    %103 = vector.load %arg13[%c0_50, %c0_51] : memref<1x5xf32, #tpu.memory_space<vmem>>, vector<1x5xf32>
    %104 = vector.extract_strided_slice %101 {offsets = [0, 15, 0], sizes = [1, 1, 8], strides = [1, 1, 1]} : vector<1x16x8xf32> to vector<1x1x8xf32>
    %105 = vector.shape_cast %104 : vector<1x1x8xf32> to vector<1x8xf32>
    %cst_52 = arith.constant dense<0.000000e+00> : vector<1x5xf32>
    %106 = tpu.matmul %105, %102, %cst_52 {dimension_numbers = #tpu.dot_dimension_numbers<[1], [0], [0], [1], [0, 0, 1, 1], [], []>} : vector<1x8xf32>, vector<8x5xf32>, vector<1x5xf32> -> vector<1x5xf32>
    %107 = arith.addf %106, %103 : vector<1x5xf32>
    %108 = vector.shape_cast %107 : vector<1x5xf32> to vector<1x1x5xf32>
    %c0_53 = arith.constant 0 : index
    %c0_54 = arith.constant 0 : index
    %c0_55 = arith.constant 0 : index
    %109 = vector.load %arg14[%c0_53, %c0_54, %c0_55] : memref<1x1x5xf32, #tpu.memory_space<vmem>>, vector<1x1x5xf32>
    tpu.vector_store %arg14[%c0_53, %c0_54, %c0_55], %108 {strides = array<i32>} : memref<1x1x5xf32, #tpu.memory_space<vmem>>, vector<1x1x5xf32>,
    return
  }
  func.func @transform_0(%arg0: i32) -> (i32, i32, i32) {
    %c0_i32 = arith.constant 0 : i32
    %c0_i32_0 = arith.constant 0 : i32
    %c0_i32_1 = arith.constant 0 : i32
    return %arg0, %c0_i32, %c0_i32_0 : i32, i32, i32
  }
  func.func @transform_1(%arg0: i32) -> (i32, i32, i32) {
    %c0_i32 = arith.constant 0 : i32
    %c0_i32_0 = arith.constant 0 : i32
    %c0_i32_1 = arith.constant 0 : i32
    %c0_i32_2 = arith.constant 0 : i32
    return %c0_i32, %c0_i32_0, %c0_i32_1 : i32, i32, i32
  }
  func.func @transform_2(%arg0: i32) -> (i32, i32) {
    %c0_i32 = arith.constant 0 : i32
    %c0_i32_0 = arith.constant 0 : i32
    %c0_i32_1 = arith.constant 0 : i32
    return %c0_i32, %c0_i32_0 : i32, i32
  }
  func.func @transform_3(%arg0: i32) -> (i32, i32, i32) {
    %c0_i32 = arith.constant 0 : i32
    %c0_i32_0 = arith.constant 0 : i32
    %c0_i32_1 = arith.constant 0 : i32
    %c0_i32_2 = arith.constant 0 : i32
    return %c0_i32, %c0_i32_0, %c0_i32_1 : i32, i32, i32
  }
  func.func @transform_4(%arg0: i32) -> (i32, i32) {
    %c0_i32 = arith.constant 0 : i32
    %c0_i32_0 = arith.constant 0 : i32
    %c0_i32_1 = arith.constant 0 : i32
    return %c0_i32, %c0_i32_0 : i32, i32
  }
  func.func @transform_5(%arg0: i32) -> (i32, i32) {
    %c0_i32 = arith.constant 0 : i32
    %c0_i32_0 = arith.constant 0 : i32
    %c0_i32_1 = arith.constant 0 : i32
    return %c0_i32, %c0_i32_0 : i32, i32
  }
  func.func @transform_6(%arg0: i32) -> (i32, i32) {
    %c0_i32 = arith.constant 0 : i32
    %c0_i32_0 = arith.constant 0 : i32
    %c0_i32_1 = arith.constant 0 : i32
    return %c0_i32, %c0_i32_0 : i32, i32
  }
  func.func @transform_7(%arg0: i32) -> (i32, i32, i32) {
    %c0_i32 = arith.constant 0 : i32
    %c0_i32_0 = arith.constant 0 : i32
    %c0_i32_1 = arith.constant 0 : i32
    %c0_i32_2 = arith.constant 0 : i32
    return %c0_i32, %c0_i32_0, %c0_i32_1 : i32, i32, i32
  }
  func.func @transform_8(%arg0: i32) -> (i32, i32) {
    %c0_i32 = arith.constant 0 : i32
    %c0_i32_0 = arith.constant 0 : i32
    %c0_i32_1 = arith.constant 0 : i32
    return %c0_i32, %c0_i32_0 : i32, i32
  }
  func.func @transform_9(%arg0: i32) -> (i32, i32, i32) {
    %c0_i32 = arith.constant 0 : i32
    %c0_i32_0 = arith.constant 0 : i32
    %c0_i32_1 = arith.constant 0 : i32
    %c0_i32_2 = arith.constant 0 : i32
    return %c0_i32, %c0_i32_0, %c0_i32_1 : i32, i32, i32
  }
  func.func @transform_10(%arg0: i32) -> (i32, i32) {
    %c0_i32 = arith.constant 0 : i32
    %c0_i32_0 = arith.constant 0 : i32
    %c0_i32_1 = arith.constant 0 : i32
    return %c0_i32, %c0_i32_0 : i32, i32
  }
  func.func @transform_11(%arg0: i32) -> (i32, i32) {
    %c0_i32 = arith.constant 0 : i32
    %c0_i32_0 = arith.constant 0 : i32
    %c0_i32_1 = arith.constant 0 : i32
    return %c0_i32, %c0_i32_0 : i32, i32
  }
  func.func @transform_12(%arg0: i32) -> (i32, i32) {
    %c0_i32 = arith.constant 0 : i32
    %c0_i32_0 = arith.constant 0 : i32
    %c0_i32_1 = arith.constant 0 : i32
    return %c0_i32, %c0_i32_0 : i32, i32
  }
  func.func @transform_13(%arg0: i32) -> (i32, i32, i32) {
    %c0_i32 = arith.constant 0 : i32
    %c0_i32_0 = arith.constant 0 : i32
    %c0_i32_1 = arith.constant 0 : i32
    return %arg0, %c0_i32, %c0_i32_0 : i32, i32, i32
  }
}

</mosaic_0001>

<llo_original>
// kernel: tpu_custom_call.1
$region0: #{tpu_custom_call.1}
  #allocation0 [shape = 'u32[]', space=smem, size = 0x4, offset = 0x4, fixed_abs, tag = 'smem constant byte address 0x4 - core index']
  #allocation1 [shape = 'u32[144,128]{1,0:T(1,128)}', space=vmem, size = 0x12000, scoped, tag = 'internal scratch']
  %s0 = inlined_call_operand.vmem [shape: f32[2,16,4], index: 0, kind: input, shape index: {}]
  %s1 = inlined_call_operand.hbm [shape: f32[2,4,8], index: 1, kind: input, shape index: {}]
  %s2 = inlined_call_operand.hbm [shape: f32[1,8], index: 2, kind: input, shape index: {}]
  %s3 = inlined_call_operand.vmem [shape: f32[2,8,8], index: 3, kind: input, shape index: {}]
  %s4 = inlined_call_operand.hbm [shape: f32[1,8], index: 4, kind: input, shape index: {}]
  %s5 = inlined_call_operand.hbm [shape: f32[4,8], index: 5, kind: input, shape index: {}]
  %s6 = inlined_call_operand.hbm [shape: f32[1,8], index: 6, kind: input, shape index: {}]
  %s7 = inlined_call_operand.vmem [shape: f32[2,8,8], index: 7, kind: input, shape index: {}]
  %s8 = inlined_call_operand.hbm [shape: f32[1,8], index: 8, kind: input, shape index: {}]
  %s9 = inlined_call_operand.vmem [shape: f32[2,8,8], index: 9, kind: input, shape index: {}]
  %s10 = inlined_call_operand.vmem [shape: f32[1,8], index: 10, kind: input, shape index: {}]
  %s11 = inlined_call_operand.vmem [shape: f32[8,5], index: 11, kind: input, shape index: {}]
  %s12 = inlined_call_operand.vmem [shape: f32[1,5], index: 12, kind: input, shape index: {}]
  %s13 = inlined_call_operand.hbm [shape: f32[2,1,5], index: 13, kind: output, shape index: {}]
  %s14 = sld [smem:[#allocation0]]
  $region109: #{tpu_custom_call.1} parent=0
    _
  %s16 = ssub.s32 1, %s14
  %s17 = scalar_select 0, %s16, %s14
  $region1: #{tpu_custom_call.1} parent=0
    #allocation2 [shape = 'u8[4096]{0}', space=vmem, size = 0x1000, scoped, tag = 'input window, operand 1, single buffered']
    #allocation3 [shape = 's32[2]{0}', space=sflag, size = 0x8, scoped, tag = 'scoped memory for tpu_custom_call.1']
    #allocation4 [shape = 's32[2]{0}', space=sflag, size = 0x8, scoped, tag = 'scoped memory for tpu_custom_call.1']
    #allocation5 [shape = 'u8[512]{0}', space=vmem, size = 0x400, scoped, tag = 'input window, operand 2, single buffered']
    #allocation6 [shape = 's32[1]{0}', space=sflag, size = 0x4, scoped, tag = 'scoped memory for tpu_custom_call.1']
    #allocation7 [shape = 'u8[512]{0}', space=vmem, size = 0x400, scoped, tag = 'input window, operand 4, single buffered']
    #allocation8 [shape = 'u8[2048]{0}', space=vmem, size = 0x800, scoped, tag = 'input window, operand 5, single buffered']
    #allocation9 [shape = 's32[1]{0}', space=sflag, size = 0x4, scoped, tag = 'scoped memory for tpu_custom_call.1']
    #allocation10 [shape = 'u8[512]{0}', space=vmem, size = 0x400, scoped, tag = 'input window, operand 6, single buffered']
    #allocation11 [shape = 'u8[512]{0}', space=vmem, size = 0x400, scoped, tag = 'input window, operand 8, single buffered']
    #allocation12 [shape = 's32[1]{0}', space=sflag, size = 0x4, scoped, tag = 'scoped memory for tpu_custom_call.1']
    #allocation13 [shape = 'u8[1024]{0}', space=vmem, size = 0x400, scoped, tag = 'output window, operand 0']
    %18 = vsyncpa [#allocation3], 0
    %19 = vsyncpa [#allocation6], 0
    %20 = vsyncpa [#allocation9], 0
    %21 = vsyncpa [#allocation12], 0
    %22 = vsyncpa [#allocation4], 0
    %s23 = scalar_lea.sflag [#allocation4], 1
    %24 = vsyncpa %s23, 0
    loop: start=0, step=1, limit=4
    $region2: #{tpu_custom_call.1} parent=1 // loop_pre_header
      _
    $region3: #{tpu_custom_call.1} parent=1 // loop_header
      %s26 = sphi 0, %s30
      %p27 = scmp.ge.s32.totalorder %s26, 4
      %s36 = sphi 0, %s38
      %s39 = sphi 0, %s36
      %s40 = sphi 0, %s39
      %s56 = sphi 0, %s40
      %s60 = sphi 0, %s60
      %s62 = sphi 0, %s60
      %s63 = sphi 0, %s62
      %s77 = sphi 0, %s63
      %s81 = sphi 0, %s81
      %s83 = sphi 0, %s81
      %s84 = sphi 0, %s83
      %s98 = sphi 0, %s84
      %s102 = sphi 0, %s102
      %s104 = sphi 0, %s102
      %s105 = sphi 0, %s104
      %s119 = sphi 0, %s105
      %s123 = sphi 0, %s123
      %s125 = sphi 0, %s123
      %s126 = sphi 0, %s125
      %s140 = sphi 0, %s126
      %s144 = sphi 0, %s144
      %s146 = sphi 0, %s144
      %s147 = sphi 0, %s146
      %s161 = sphi 0, %s147
      %s165 = sphi 0, %s165
      %s167 = sphi 0, %s165
      %s168 = sphi 0, %s167
      %s182 = sphi 0, %s168
      %s186 = sphi 0, %s186
      %s188 = sphi 0, %s186
      %s189 = sphi 0, %s188
      %s203 = sphi 0, %s189
      %s207 = sphi 0, %s207
      %s209 = sphi 0, %s207
      %s210 = sphi 0, %s209
      %s224 = sphi 0, %s210
      %s228 = sphi 0, %s228
      %s230 = sphi 0, %s228
      %s231 = sphi 0, %s230
      %s245 = sphi 0, %s231
      %s249 = sphi 0, %s249
      %s251 = sphi 0, %s249
      %s252 = sphi 0, %s251
      %s266 = sphi 0, %s252
      %s270 = sphi 0, %s270
      %s272 = sphi 0, %s270
      %s273 = sphi 0, %s272
      %s287 = sphi 0, %s273
      %s291 = sphi 0, %s291
      %s293 = sphi 0, %s291
      %s294 = sphi 0, %s293
      %s308 = sphi 0, %s294
      %s314 = sphi 0, %s316
      %s317 = sphi 0, %s314
      %s318 = sphi 0, %s317
      %s334 = sphi 0, %s318
    $region4: #{tpu_custom_call.1} parent=1 // loop_header_branch
      %29 = sbr.rel (%p27) target = $region8
    $region5: #{tpu_custom_call.1} parent=1 // loop_body
      %s31 = ssub.s32 %s26, 1
      %s32 = ssub.s32 %s26, 2
      %s33 = sadd.s32 %s26, 1
      %s34 = ssub.s32 %s26, %s33
      %p35 = scmp.eq.s32.totalorder %s34, 0
      %s37 = sadd.s32 %s36, 1
      %s38 = scalar_select %p35, %s36, %s37
      %p41 = pneg %p35
      %p42 = scmp.eq.s32.totalorder %s26, 1
      %p43 = por %p41, %p42
      %p44 = scmp.ne.s32.totalorder %s36, %s39
      %p45 = scmp.eq.s32.totalorder %s26, 0
      %p46 = por %p44, %p45
      %p47 = scmp.ne.s32.totalorder %s36, %s39
      %p48 = scmp.eq.s32.totalorder %s31, 1
      %p49 = por %p47, %p48
      %p50 = scmp.ne.s32.totalorder %s39, %s40
      %p51 = scmp.eq.s32.totalorder %s31, 0
      %p52 = por %p50, %p51
      %p53 = scmp.ne.s32.totalorder %s39, %s40
      %p54 = scmp.eq.s32.totalorder %s32, 1
      %p55 = por %p53, %p54
      %p57 = scmp.ne.s32.totalorder %s40, %s56
      %p58 = scmp.eq.s32.totalorder %s32, 0
      %p59 = por %p57, %p58
      %s61 = sadd.s32 %s60, 1
      %p64 = scmp.eq.s32.totalorder %s26, 1
      %p65 = scmp.ne.s32.totalorder %s60, %s62
      %p66 = scmp.eq.s32.totalorder %s26, 0
      %p67 = por %p65, %p66
      %p68 = scmp.ne.s32.totalorder %s60, %s62
      %p69 = scmp.eq.s32.totalorder %s31, 1
      %p70 = por %p68, %p69
      %p71 = scmp.ne.s32.totalorder %s62, %s63
      %p72 = scmp.eq.s32.totalorder %s31, 0
      %p73 = por %p71, %p72
      %p74 = scmp.ne.s32.totalorder %s62, %s63
      %p75 = scmp.eq.s32.totalorder %s32, 1
      %p76 = por %p74, %p75
      %p78 = scmp.ne.s32.totalorder %s63, %s77
      %p79 = scmp.eq.s32.totalorder %s32, 0
      %p80 = por %p78, %p79
      %s82 = sadd.s32 %s81, 1
      %p85 = scmp.eq.s32.totalorder %s26, 1
      %p86 = scmp.ne.s32.totalorder %s81, %s83
      %p87 = scmp.eq.s32.totalorder %s26, 0
      %p88 = por %p86, %p87
      %p89 = scmp.ne.s32.totalorder %s81, %s83
      %p90 = scmp.eq.s32.totalorder %s31, 1
      %p91 = por %p89, %p90
      %p92 = scmp.ne.s32.totalorder %s83, %s84
      %p93 = scmp.eq.s32.totalorder %s31, 0
      %p94 = por %p92, %p93
      %p95 = scmp.ne.s32.totalorder %s83, %s84
      %p96 = scmp.eq.s32.totalorder %s32, 1
      %p97 = por %p95, %p96
      %p99 = scmp.ne.s32.totalorder %s84, %s98
      %p100 = scmp.eq.s32.totalorder %s32, 0
      %p101 = por %p99, %p100
      %s103 = sadd.s32 %s102, 1
      %p106 = scmp.eq.s32.totalorder %s26, 1
      %p107 = scmp.ne.s32.totalorder %s102, %s104
      %p108 = scmp.eq.s32.totalorder %s26, 0
      %p109 = por %p107, %p108
      %p110 = scmp.ne.s32.totalorder %s102, %s104
      %p111 = scmp.eq.s32.totalorder %s31, 1
      %p112 = por %p110, %p111
      %p113 = scmp.ne.s32.totalorder %s104, %s105
      %p114 = scmp.eq.s32.totalorder %s31, 0
      %p115 = por %p113, %p114
      %p116 = scmp.ne.s32.totalorder %s104, %s105
      %p117 = scmp.eq.s32.totalorder %s32, 1
      %p118 = por %p116, %p117
      %p120 = scmp.ne.s32.totalorder %s105, %s119
      %p121 = scmp.eq.s32.totalorder %s32, 0
      %p122 = por %p120, %p121
      %s124 = sadd.s32 %s123, 1
      %p127 = scmp.eq.s32.totalorder %s26, 1
      %p128 = scmp.ne.s32.totalorder %s123, %s125
      %p129 = scmp.eq.s32.totalorder %s26, 0
      %p130 = por %p128, %p129
      %p131 = scmp.ne.s32.totalorder %s123, %s125
      %p132 = scmp.eq.s32.totalorder %s31, 1
      %p133 = por %p131, %p132
      %p134 = scmp.ne.s32.totalorder %s125, %s126
      %p135 = scmp.eq.s32.totalorder %s31, 0
      %p136 = por %p134, %p135
      %p137 = scmp.ne.s32.totalorder %s125, %s126
      %p138 = scmp.eq.s32.totalorder %s32, 1
      %p139 = por %p137, %p138
      %p141 = scmp.ne.s32.totalorder %s126, %s140
      %p142 = scmp.eq.s32.totalorder %s32, 0
      %p143 = por %p141, %p142
      %s145 = sadd.s32 %s144, 1
      %p148 = scmp.eq.s32.totalorder %s26, 1
      %p149 = scmp.ne.s32.totalorder %s144, %s146
      %p150 = scmp.eq.s32.totalorder %s26, 0
      %p151 = por %p149, %p150
      %p152 = scmp.ne.s32.totalorder %s144, %s146
      %p153 = scmp.eq.s32.totalorder %s31, 1
      %p154 = por %p152, %p153
      %p155 = scmp.ne.s32.totalorder %s146, %s147
      %p156 = scmp.eq.s32.totalorder %s31, 0
      %p157 = por %p155, %p156
      %p158 = scmp.ne.s32.totalorder %s146, %s147
      %p159 = scmp.eq.s32.totalorder %s32, 1
      %p160 = por %p158, %p159
      %p162 = scmp.ne.s32.totalorder %s147, %s161
      %p163 = scmp.eq.s32.totalorder %s32, 0
      %p164 = por %p162, %p163
      %s166 = sadd.s32 %s165, 1
      %p169 = scmp.eq.s32.totalorder %s26, 1
      %p170 = scmp.ne.s32.totalorder %s165, %s167
      %p171 = scmp.eq.s32.totalorder %s26, 0
      %p172 = por %p170, %p171
      %p173 = scmp.ne.s32.totalorder %s165, %s167
      %p174 = scmp.eq.s32.totalorder %s31, 1
      %p175 = por %p173, %p174
      %p176 = scmp.ne.s32.totalorder %s167, %s168
      %p177 = scmp.eq.s32.totalorder %s31, 0
      %p178 = por %p176, %p177
      %p179 = scmp.ne.s32.totalorder %s167, %s168
      %p180 = scmp.eq.s32.totalorder %s32, 1
      %p181 = por %p179, %p180
      %p183 = scmp.ne.s32.totalorder %s168, %s182
      %p184 = scmp.eq.s32.totalorder %s32, 0
      %p185 = por %p183, %p184
      %s187 = sadd.s32 %s186, 1
      %p190 = scmp.eq.s32.totalorder %s26, 1
      %p191 = scmp.ne.s32.totalorder %s186, %s188
      %p192 = scmp.eq.s32.totalorder %s26, 0
      %p193 = por %p191, %p192
      %p194 = scmp.ne.s32.totalorder %s186, %s188
      %p195 = scmp.eq.s32.totalorder %s31, 1
      %p196 = por %p194, %p195
      %p197 = scmp.ne.s32.totalorder %s188, %s189
      %p198 = scmp.eq.s32.totalorder %s31, 0
      %p199 = por %p197, %p198
      %p200 = scmp.ne.s32.totalorder %s188, %s189
      %p201 = scmp.eq.s32.totalorder %s32, 1
      %p202 = por %p200, %p201
      %p204 = scmp.ne.s32.totalorder %s189, %s203
      %p205 = scmp.eq.s32.totalorder %s32, 0
      %p206 = por %p204, %p205
      %s208 = sadd.s32 %s207, 1
      %p211 = scmp.eq.s32.totalorder %s26, 1
      %p212 = scmp.ne.s32.totalorder %s207, %s209
      %p213 = scmp.eq.s32.totalorder %s26, 0
      %p214 = por %p212, %p213
      %p215 = scmp.ne.s32.totalorder %s207, %s209
      %p216 = scmp.eq.s32.totalorder %s31, 1
      %p217 = por %p215, %p216
      %p218 = scmp.ne.s32.totalorder %s209, %s210
      %p219 = scmp.eq.s32.totalorder %s31, 0
      %p220 = por %p218, %p219
      %p221 = scmp.ne.s32.totalorder %s209, %s210
      %p222 = scmp.eq.s32.totalorder %s32, 1
      %p223 = por %p221, %p222
      %p225 = scmp.ne.s32.totalorder %s210, %s224
      %p226 = scmp.eq.s32.totalorder %s32, 0
      %p227 = por %p225, %p226
      %s229 = sadd.s32 %s228, 1
      %p232 = scmp.eq.s32.totalorder %s26, 1
      %p233 = scmp.ne.s32.totalorder %s228, %s230
      %p234 = scmp.eq.s32.totalorder %s26, 0
      %p235 = por %p233, %p234
      %p236 = scmp.ne.s32.totalorder %s228, %s230
      %p237 = scmp.eq.s32.totalorder %s31, 1
      %p238 = por %p236, %p237
      %p239 = scmp.ne.s32.totalorder %s230, %s231
      %p240 = scmp.eq.s32.totalorder %s31, 0
      %p241 = por %p239, %p240
      %p242 = scmp.ne.s32.totalorder %s230, %s231
      %p243 = scmp.eq.s32.totalorder %s32, 1
      %p244 = por %p242, %p243
      %p246 = scmp.ne.s32.totalorder %s231, %s245
      %p247 = scmp.eq.s32.totalorder %s32, 0
      %p248 = por %p246, %p247
      %s250 = sadd.s32 %s249, 1
      %p253 = scmp.eq.s32.totalorder %s26, 1
      %p254 = scmp.ne.s32.totalorder %s249, %s251
      %p255 = scmp.eq.s32.totalorder %s26, 0
      %p256 = por %p254, %p255
      %p257 = scmp.ne.s32.totalorder %s249, %s251
      %p258 = scmp.eq.s32.totalorder %s31, 1
      %p259 = por %p257, %p258
      %p260 = scmp.ne.s32.totalorder %s251, %s252
      %p261 = scmp.eq.s32.totalorder %s31, 0
      %p262 = por %p260, %p261
      %p263 = scmp.ne.s32.totalorder %s251, %s252
      %p264 = scmp.eq.s32.totalorder %s32, 1
      %p265 = por %p263, %p264
      %p267 = scmp.ne.s32.totalorder %s252, %s266
      %p268 = scmp.eq.s32.totalorder %s32, 0
      %p269 = por %p267, %p268
      %s271 = sadd.s32 %s270, 1
      %p274 = scmp.eq.s32.totalorder %s26, 1
      %p275 = scmp.ne.s32.totalorder %s270, %s272
      %p276 = scmp.eq.s32.totalorder %s26, 0
      %p277 = por %p275, %p276
      %p278 = scmp.ne.s32.totalorder %s270, %s272
      %p279 = scmp.eq.s32.totalorder %s31, 1
      %p280 = por %p278, %p279
      %p281 = scmp.ne.s32.totalorder %s272, %s273
      %p282 = scmp.eq.s32.totalorder %s31, 0
      %p283 = por %p281, %p282
      %p284 = scmp.ne.s32.totalorder %s272, %s273
      %p285 = scmp.eq.s32.totalorder %s32, 1
      %p286 = por %p284, %p285
      %p288 = scmp.ne.s32.totalorder %s273, %s287
      %p289 = scmp.eq.s32.totalorder %s32, 0
      %p290 = por %p288, %p289
      %s292 = sadd.s32 %s291, 1
      %p295 = scmp.eq.s32.totalorder %s26, 1
      %p296 = scmp.ne.s32.totalorder %s291, %s293
      %p297 = scmp.eq.s32.totalorder %s26, 0
      %p298 = por %p296, %p297
      %p299 = scmp.ne.s32.totalorder %s291, %s293
      %p300 = scmp.eq.s32.totalorder %s31, 1
      %p301 = por %p299, %p300
      %p302 = scmp.ne.s32.totalorder %s293, %s294
      %p303 = scmp.eq.s32.totalorder %s31, 0
      %p304 = por %p302, %p303
      %p305 = scmp.ne.s32.totalorder %s293, %s294
      %p306 = scmp.eq.s32.totalorder %s32, 1
      %p307 = por %p305, %p306
      %p309 = scmp.ne.s32.totalorder %s294, %s308
      %p310 = scmp.eq.s32.totalorder %s32, 0
      %p311 = por %p309, %p310
      %s312 = ssub.s32 %s26, %s33
      %p313 = scmp.eq.s32.totalorder %s312, 0
      %s315 = sadd.s32 %s314, 1
      %s316 = scalar_select %p313, %s314, %s315
      %p319 = pneg %p313
      %p320 = scmp.eq.s32.totalorder %s26, 1
      %p321 = por %p319, %p320
      %p322 = scmp.ne.s32.totalorder %s314, %s317
      %p323 = scmp.eq.s32.totalorder %s26, 0
      %p324 = por %p322, %p323
      %p325 = scmp.ne.s32.totalorder %s314, %s317
      %p326 = scmp.eq.s32.totalorder %s31, 1
      %p327 = por %p325, %p326
      %p328 = scmp.ne.s32.totalorder %s317, %s318
      %p329 = scmp.eq.s32.totalorder %s31, 0
      %p330 = por %p328, %p329
      %p331 = scmp.ne.s32.totalorder %s317, %s318
      %p332 = scmp.eq.s32.totalorder %s32, 1
      %p333 = por %p331, %p332
      %p335 = scmp.ne.s32.totalorder %s318, %s334
      %p336 = scmp.eq.s32.totalorder %s32, 0
      %p337 = por %p335, %p336
      %p338 = scmp.le.s32.totalorder 1, %s26
      %p339 = scmp.lt.s32.totalorder %s26, 3
      %p340 = pnand %p338, %p339
      %p341 = pneg %p340
      // Predicated region
      $region9: #{tpu_custom_call.1} parent=5 // pred_check
        _
      $region10: #{tpu_custom_call.1} parent=5 // pred_check_branch
        %343 = sbr.rel (%p340) target = $region12
      $region11: #{tpu_custom_call.1} parent=5 // pred_region
        %s344 = ssub.s32 %s26, 1
        // Predicated region
        $region13: #{tpu_custom_call.1} parent=11 // pred_check
          %p345 = pneg %p73
        $region14: #{tpu_custom_call.1} parent=11 // pred_check_branch
          %347 = sbr.rel (%p345) target = $region16
        $region15: #{tpu_custom_call.1} parent=11 // pred_region
          %s349 = ssub.s32 128, 128
          %350 = vsyncadd [#allocation3], %s349
          %s351 = sshll.u32 [#allocation2], 4
          %s352 = int_to_ptr.vmem [resolvable:$true] %s351
          %357 = dma.hbm_to_vmem [thread:$0]  %s1, 128, %s352, [#allocation3], 64, 64, 4
        $region16: #{tpu_custom_call.1} parent=11 // pred_fallthru
          _
        // Predicated region
        $region17: #{tpu_custom_call.1} parent=11 // pred_check
          %p358 = pneg %p94
        $region18: #{tpu_custom_call.1} parent=11 // pred_check_branch
          %360 = sbr.rel (%p358) target = $region20
        $region19: #{tpu_custom_call.1} parent=11 // pred_region
          %s362 = ssub.s32 16, 16
          %363 = vsyncadd [#allocation6], %s362
          %s365 = sshll.u32 [#allocation5], 4
          %s366 = int_to_ptr.vmem [resolvable:$true] %s365
          %368 = dma.hbm_to_vmem [thread:$0]  %s2, 16, %s366, [#allocation6]
        $region20: #{tpu_custom_call.1} parent=11 // pred_fallthru
          _
        // Predicated region
        $region21: #{tpu_custom_call.1} parent=11 // pred_check
          %p369 = pneg %p115
        $region22: #{tpu_custom_call.1} parent=11 // pred_check_branch
          %371 = sbr.rel (%p369) target = $region24
        $region23: #{tpu_custom_call.1} parent=11 // pred_region
          _
        $region24: #{tpu_custom_call.1} parent=11 // pred_fallthru
          _
        // Predicated region
        $region25: #{tpu_custom_call.1} parent=11 // pred_check
          %p372 = pneg %p136
        $region26: #{tpu_custom_call.1} parent=11 // pred_check_branch
          %374 = sbr.rel (%p372) target = $region28
        $region27: #{tpu_custom_call.1} parent=11 // pred_region
          %s376 = ssub.s32 16, 16
          %377 = vsyncadd [#allocation6], %s376
          %s379 = sshll.u32 [#allocation7], 4
          %s380 = int_to_ptr.vmem [resolvable:$true] %s379
          %382 = dma.hbm_to_vmem [thread:$0]  %s4, 16, %s380, [#allocation6]
        $region28: #{tpu_custom_call.1} parent=11 // pred_fallthru
          _
        // Predicated region
        $region29: #{tpu_custom_call.1} parent=11 // pred_check
          %p383 = pneg %p157
        $region30: #{tpu_custom_call.1} parent=11 // pred_check_branch
          %385 = sbr.rel (%p383) target = $region32
        $region31: #{tpu_custom_call.1} parent=11 // pred_region
          %s387 = ssub.s32 64, 64
          %388 = vsyncadd [#allocation9], %s387
          %s390 = sshll.u32 [#allocation8], 4
          %s391 = int_to_ptr.vmem [resolvable:$true] %s390
          %393 = dma.hbm_to_vmem [thread:$0]  %s5, 64, %s391, [#allocation9]
        $region32: #{tpu_custom_call.1} parent=11 // pred_fallthru
          _
        // Predicated region
        $region33: #{tpu_custom_call.1} parent=11 // pred_check
          %p394 = pneg %p178
        $region34: #{tpu_custom_call.1} parent=11 // pred_check_branch
          %396 = sbr.rel (%p394) target = $region36
        $region35: #{tpu_custom_call.1} parent=11 // pred_region
          %s398 = ssub.s32 16, 16
          %399 = vsyncadd [#allocation9], %s398
          %s401 = sshll.u32 [#allocation10], 4
          %s402 = int_to_ptr.vmem [resolvable:$true] %s401
          %404 = dma.hbm_to_vmem [thread:$0]  %s6, 16, %s402, [#allocation9]
        $region36: #{tpu_custom_call.1} parent=11 // pred_fallthru
          _
        // Predicated region
        $region37: #{tpu_custom_call.1} parent=11 // pred_check
          %p405 = pneg %p199
        $region38: #{tpu_custom_call.1} parent=11 // pred_check_branch
          %407 = sbr.rel (%p405) target = $region40
        $region39: #{tpu_custom_call.1} parent=11 // pred_region
          _
        $region40: #{tpu_custom_call.1} parent=11 // pred_fallthru
          _
        // Predicated region
        $region41: #{tpu_custom_call.1} parent=11 // pred_check
          %p408 = pneg %p220
        $region42: #{tpu_custom_call.1} parent=11 // pred_check_branch
          %410 = sbr.rel (%p408) target = $region44
        $region43: #{tpu_custom_call.1} parent=11 // pred_region
          %s412 = ssub.s32 16, 16
          %413 = vsyncadd [#allocation12], %s412
          %s415 = sshll.u32 [#allocation11], 4
          %s416 = int_to_ptr.vmem [resolvable:$true] %s415
          %418 = dma.hbm_to_vmem [thread:$0]  %s8, 16, %s416, [#allocation12]
        $region44: #{tpu_custom_call.1} parent=11 // pred_fallthru
          _
        // Predicated region
        $region45: #{tpu_custom_call.1} parent=11 // pred_check
          %p419 = pneg %p241
        $region46: #{tpu_custom_call.1} parent=11 // pred_check_branch
          %421 = sbr.rel (%p419) target = $region48
        $region47: #{tpu_custom_call.1} parent=11 // pred_region
          _
        $region48: #{tpu_custom_call.1} parent=11 // pred_fallthru
          _
        // Predicated region
        $region49: #{tpu_custom_call.1} parent=11 // pred_check
          %p422 = pneg %p262
        $region50: #{tpu_custom_call.1} parent=11 // pred_check_branch
          %424 = sbr.rel (%p422) target = $region52
        $region51: #{tpu_custom_call.1} parent=11 // pred_region
          _
        $region52: #{tpu_custom_call.1} parent=11 // pred_fallthru
          _
        // Predicated region
        $region53: #{tpu_custom_call.1} parent=11 // pred_check
          %p425 = pneg %p283
        $region54: #{tpu_custom_call.1} parent=11 // pred_check_branch
          %427 = sbr.rel (%p425) target = $region56
        $region55: #{tpu_custom_call.1} parent=11 // pred_region
          _
        $region56: #{tpu_custom_call.1} parent=11 // pred_fallthru
          _
        // Predicated region
        $region57: #{tpu_custom_call.1} parent=11 // pred_check
          %p428 = pneg %p304
        $region58: #{tpu_custom_call.1} parent=11 // pred_check_branch
          %430 = sbr.rel (%p428) target = $region60
        $region59: #{tpu_custom_call.1} parent=11 // pred_region
          _
        $region60: #{tpu_custom_call.1} parent=11 // pred_fallthru
          _
      $region12: #{tpu_custom_call.1} parent=5 // pred_fallthru
        _
      %p431 = scmp.lt.s32.totalorder %s26, 2
      // Predicated region
      $region61: #{tpu_custom_call.1} parent=5 // pred_check
        %p432 = pneg %p431
      $region62: #{tpu_custom_call.1} parent=5 // pred_check_branch
        %434 = sbr.rel (%p432) target = $region64
      $region63: #{tpu_custom_call.1} parent=5 // pred_region
        // Predicated region
        $region65: #{tpu_custom_call.1} parent=63 // pred_check
          %p435 = pneg %p46
        $region66: #{tpu_custom_call.1} parent=63 // pred_check_branch
          %437 = sbr.rel (%p435) target = $region68
        $region67: #{tpu_custom_call.1} parent=63 // pred_region
          %p438 = scmp.lt.s32.totalorder %s26, 1
          %s439 = scalar_select %p438, %s26, 1
          %s440 = smul.addr %s439, 2
          %s441 = smul.addr %s440, 8
          %s442 = scalar_lea.vmem %s0, %s441
        $region68: #{tpu_custom_call.1} parent=63 // pred_fallthru
          _
      $region64: #{tpu_custom_call.1} parent=5 // pred_fallthru
        _
      %p443 = scmp.le.s32.totalorder 1, %s26
      %p444 = scmp.lt.s32.totalorder %s26, 3
      %p445 = pnand %p443, %p444
      %p446 = pneg %p445
      // Predicated region
      $region69: #{tpu_custom_call.1} parent=5 // pred_check
        _
      $region70: #{tpu_custom_call.1} parent=5 // pred_check_branch
        %448 = sbr.rel (%p445) target = $region72
      $region71: #{tpu_custom_call.1} parent=5 // pred_region
        %s449 = ssub.s32 %s26, 1
        // Predicated region
        $region73: #{tpu_custom_call.1} parent=71 // pred_check
          %p450 = pneg %p73
        $region74: #{tpu_custom_call.1} parent=71 // pred_check_branch
          %452 = sbr.rel (%p450) target = $region76
        $region75: #{tpu_custom_call.1} parent=71 // pred_region
          %453 = dma.done [#allocation3], 128
        $region76: #{tpu_custom_call.1} parent=71 // pred_fallthru
          _
        // Predicated region
        $region77: #{tpu_custom_call.1} parent=71 // pred_check
          %p454 = pneg %p94
        $region78: #{tpu_custom_call.1} parent=71 // pred_check_branch
          %456 = sbr.rel (%p454) target = $region80
        $region79: #{tpu_custom_call.1} parent=71 // pred_region
          %457 = dma.done [#allocation6], 16
        $region80: #{tpu_custom_call.1} parent=71 // pred_fallthru
          _
        // Predicated region
        $region81: #{tpu_custom_call.1} parent=71 // pred_check
          %p458 = pneg %p136
        $region82: #{tpu_custom_call.1} parent=71 // pred_check_branch
          %460 = sbr.rel (%p458) target = $region84
        $region83: #{tpu_custom_call.1} parent=71 // pred_region
          %461 = dma.done [#allocation6], 16
        $region84: #{tpu_custom_call.1} parent=71 // pred_fallthru
          _
        // Predicated region
        $region85: #{tpu_custom_call.1} parent=71 // pred_check
          %p462 = pneg %p157
        $region86: #{tpu_custom_call.1} parent=71 // pred_check_branch
          %464 = sbr.rel (%p462) target = $region88
        $region87: #{tpu_custom_call.1} parent=71 // pred_region
          %465 = dma.done [#allocation9], 64
        $region88: #{tpu_custom_call.1} parent=71 // pred_fallthru
          _
        // Predicated region
        $region89: #{tpu_custom_call.1} parent=71 // pred_check
          %p466 = pneg %p178
        $region90: #{tpu_custom_call.1} parent=71 // pred_check_branch
          %468 = sbr.rel (%p466) target = $region92
        $region91: #{tpu_custom_call.1} parent=71 // pred_region
          %469 = dma.done [#allocation9], 16
        $region92: #{tpu_custom_call.1} parent=71 // pred_fallthru
          _
        // Predicated region
        $region93: #{tpu_custom_call.1} parent=71 // pred_check
          %p470 = pneg %p220
        $region94: #{tpu_custom_call.1} parent=71 // pred_check_branch
          %472 = sbr.rel (%p470) target = $region96
        $region95: #{tpu_custom_call.1} parent=71 // pred_region
          %473 = dma.done [#allocation12], 16
        $region96: #{tpu_custom_call.1} parent=71 // pred_fallthru
          _
        %p474 = scmp.lt.s32.totalorder %s31, 1
        %s475 = scalar_select %p474, %s31, 1
        %s476 = smul.addr %s475, 2
        %s477 = smul.addr %s476, 8
        %s478 = scalar_lea.vmem %s0, %s477
        %p479 = pneg %p52
        %p480 = pneg %p49
        %p481 = pneg %p73
        %p482 = pneg %p70
        %p483 = pneg %p94
        %p484 = pneg %p91
        %p485 = pneg %p115
        %p486 = pneg %p112
        %p487 = pneg %p136
        %p488 = pneg %p133
        %p489 = pneg %p157
        %p490 = pneg %p154
        %p491 = pneg %p178
        %p492 = pneg %p175
        %p493 = pneg %p199
        %p494 = pneg %p196
        %p495 = pneg %p220
        %p496 = pneg %p217
        %p497 = pneg %p241
        %p498 = pneg %p238
        %p499 = pneg %p262
        %p500 = pneg %p259
        %p501 = pneg %p283
        %p502 = pneg %p280
        %p503 = pneg %p304
        %p504 = pneg %p301
        %p505 = pneg %p330
        %p506 = pneg %p327
        %s507 = sand.u32 %s317, 1
        %s508 = scalar_lea.sflag [#allocation4], %s507
        %s509 = sand.u32 %s317, 1
        %s510 = scalar_lea.vmem [#allocation13], %s509
        %p511 = scmp.lt.s32.totalorder %s31, 1
        %s512 = scalar_select %p511, %s31, 1
        %s513 = smul.addr %s512, 2
        %s514 = smul.addr %s513, 8
        %s515 = scalar_lea.vmem %s0, %s514
        %v516 = vld [vmem:[%s515] sm:$0xff]
        %v517 = vld [vmem:[%s515 + $0x8] sm:$0xff]
        %v518 = vld [vmem:[#allocation2] sm:$0xf]
        %v519 = vld [vmem:[#allocation2 + $0x4] sm:$0xf]
        %v520 = vld [vmem:[#allocation5] sm:$0x1]
        %v521 = vld [vmem:[%s3] sm:$0xff]
        %v522 = vld [vmem:[%s3 + $0x8] sm:$0xff]
        %v523 = vld [vmem:[#allocation7] sm:$0x1]
        %vm526 = vcmask 1040384
        %v527 = vrot.slane %v516, 7
        %v528 = vrot.slane %v517, 7
        %v529 = vsel %vm526, %v527, %v528
        %v531 = vsel %vm526, 0.0, %v527
        %vm533 = vcmask 1046528
        %v534 = vrot.slane %v531, 1
        %v535 = vrot.slane %v529, 1
        %v536 = vsel %vm533, %v534, %v535
        %v537 = vrot.slane %v528, 1
        %v538 = vsel %vm533, %v535, %v537
        %vm539 = vcmask 31744
        %v540 = vsel %vm539, %v536, 0
        %v542 = vsel %vm539, %v538, 0
        %vm544 = vcmask 1043456
        %v546 = vsel %vm544, %v519, 0
        %548 = vmatprep.subr.mxu0 0.0
        %549 = vmatpush1.msra.mxu0 0.0
        %550 = vmatprep.subr.mxu0 0.0
        %551 = vmatpush1.msra.mxu0 0.0
        %552 = vmatprep.subr.mxu0 0.0
        %553 = vmatpush1.msra.mxu0 0.0
        %554 = vmatprep.subr.mxu0 0.0
        %555 = vmatpush1.msra.mxu0 0.0
        %556 = vmatprep.subr.mxu0 0.0
        %557 = vmatpush1.msra.mxu0 0.0
        %558 = vmatprep.subr.mxu0 0.0
        %559 = vmatpush1.msra.mxu0 0.0
        %560 = vmatprep.subr.mxu0 0.0
        %561 = vmatpush1.msra.mxu0 0.0
        %562 = vmatprep.subr.mxu0 0.0
        %563 = vmatpush1.msra.mxu0 0.0
        %564 = vmatprep.subr.mxu0 0.0
        %565 = vmatpush1.msra.mxu0 0.0
        %566 = vmatprep.subr.mxu0 0.0
        %567 = vmatpush1.msra.mxu0 0.0
        %568 = vmatprep.subr.mxu0 0.0
        %569 = vmatpush1.msra.mxu0 0.0
        %570 = vmatprep.subr.mxu0 0.0
        %571 = vmatpush1.msra.mxu0 0.0
        %572 = vmatprep.subr.mxu0 0.0
        %573 = vmatpush1.msra.mxu0 0.0
        %574 = vmatprep.subr.mxu0 0.0
        %575 = vmatpush1.msra.mxu0 0.0
        %576 = vmatprep.subr.mxu0 0.0
        %577 = vmatpush1.msra.mxu0 0.0
        %578 = vmatprep.subr.mxu0 0.0
        %579 = vmatpush1.msra.mxu0 %v546
        %580 = vmatprep.subr.mxu0 0.0
        %581 = vmatpush2.msra.mxu0 0.0
        %582 = vmatprep.subr.mxu0 0.0
        %583 = vmatpush2.msra.mxu0 0.0
        %584 = vmatprep.subr.mxu0 0.0
        %585 = vmatpush2.msra.mxu0 0.0
        %586 = vmatprep.subr.mxu0 0.0
        %587 = vmatpush2.msra.mxu0 0.0
        %588 = vmatprep.subr.mxu0 0.0
        %589 = vmatpush2.msra.mxu0 0.0
        %590 = vmatprep.subr.mxu0 0.0
        %591 = vmatpush2.msra.mxu0 0.0
        %592 = vmatprep.subr.mxu0 0.0
        %593 = vmatpush2.msra.mxu0 0.0
        %594 = vmatprep.subr.mxu0 0.0
        %595 = vmatpush2.msra.mxu0 0.0
        %596 = vmatprep.subr.mxu0 0.0
        %597 = vmatpush2.msra.mxu0 0.0
        %598 = vmatprep.subr.mxu0 0.0
        %599 = vmatpush2.msra.mxu0 0.0
        %600 = vmatprep.subr.mxu0 0.0
        %601 = vmatpush2.msra.mxu0 0.0
        %602 = vmatprep.subr.mxu0 0.0
        %603 = vmatpush2.msra.mxu0 0.0
        %604 = vmatprep.subr.mxu0 0.0
        %605 = vmatpush2.msra.mxu0 0.0
        %606 = vmatprep.subr.mxu0 0.0
        %607 = vmatpush2.msra.mxu0 0.0
        %608 = vmatprep.subr.mxu0 0.0
        %609 = vmatpush2.msra.mxu0 0.0
        %610 = vmatprep.subr.mxu0 0.0
        %611 = vmatpush2.msra.mxu0 0.0
        %612 = vmatprep.mubr.f32.mxu0 0.0
        %613 = vmatmul.mubr.f32.gmra.mxu0 %v540
        %v614 = vpop.f32.mrf.mxu0
        %v615 = vadd.f32 0.0, %v614
        %v616 = vpop.f32.mrf.mxu0
        %617 = vmatprep.mubr.f32.mxu0 0.0
        %618 = vmatmul.mubr.f32.gmra.mxu0 %v542
        %v619 = vpop.f32.mrf.mxu0
        %v620 = vadd.f32 0.0, %v619
        %v621 = vpop.f32.mrf.mxu0
        %622 = vdwg.mxu0
        %v623 = vsel %vm539, %v531, 0
        %v625 = vsel %vm539, %v529, 0
        %v628 = vsel %vm544, %v518, 0
        %630 = vmatprep.subr.mxu0 0.0
        %631 = vmatpush1.msra.mxu0 0.0
        %632 = vmatprep.subr.mxu0 0.0
        %633 = vmatpush1.msra.mxu0 0.0
        %634 = vmatprep.subr.mxu0 0.0
        %635 = vmatpush1.msra.mxu0 0.0
        %636 = vmatprep.subr.mxu0 0.0
        %637 = vmatpush1.msra.mxu0 0.0
        %638 = vmatprep.subr.mxu0 0.0
        %639 = vmatpush1.msra.mxu0 0.0
        %640 = vmatprep.subr.mxu0 0.0
        %641 = vmatpush1.msra.mxu0 0.0
        %642 = vmatprep.subr.mxu0 0.0
        %643 = vmatpush1.msra.mxu0 0.0
        %644 = vmatprep.subr.mxu0 0.0
        %645 = vmatpush1.msra.mxu0 0.0
        %646 = vmatprep.subr.mxu0 0.0
        %647 = vmatpush1.msra.mxu0 0.0
        %648 = vmatprep.subr.mxu0 0.0
        %649 = vmatpush1.msra.mxu0 0.0
        %650 = vmatprep.subr.mxu0 0.0
        %651 = vmatpush1.msra.mxu0 0.0
        %652 = vmatprep.subr.mxu0 0.0
        %653 = vmatpush1.msra.mxu0 0.0
        %654 = vmatprep.subr.mxu0 0.0
        %655 = vmatpush1.msra.mxu0 0.0
        %656 = vmatprep.subr.mxu0 0.0
        %657 = vmatpush1.msra.mxu0 0.0
        %658 = vmatprep.subr.mxu0 0.0
        %659 = vmatpush1.msra.mxu0 0.0
        %660 = vmatprep.subr.mxu0 0.0
        %661 = vmatpush1.msra.mxu0 %v628
        %662 = vmatprep.subr.mxu0 0.0
        %663 = vmatpush2.msra.mxu0 0.0
        %664 = vmatprep.subr.mxu0 0.0
        %665 = vmatpush2.msra.mxu0 0.0
        %666 = vmatprep.subr.mxu0 0.0
        %667 = vmatpush2.msra.mxu0 0.0
        %668 = vmatprep.subr.mxu0 0.0
        %669 = vmatpush2.msra.mxu0 0.0
        %670 = vmatprep.subr.mxu0 0.0
        %671 = vmatpush2.msra.mxu0 0.0
        %672 = vmatprep.subr.mxu0 0.0
        %673 = vmatpush2.msra.mxu0 0.0
        %674 = vmatprep.subr.mxu0 0.0
        %675 = vmatpush2.msra.mxu0 0.0
        %676 = vmatprep.subr.mxu0 0.0
        %677 = vmatpush2.msra.mxu0 0.0
        %678 = vmatprep.subr.mxu0 0.0
        %679 = vmatpush2.msra.mxu0 0.0
        %680 = vmatprep.subr.mxu0 0.0
        %681 = vmatpush2.msra.mxu0 0.0
        %682 = vmatprep.subr.mxu0 0.0
        %683 = vmatpush2.msra.mxu0 0.0
        %684 = vmatprep.subr.mxu0 0.0
        %685 = vmatpush2.msra.mxu0 0.0
        %686 = vmatprep.subr.mxu0 0.0
        %687 = vmatpush2.msra.mxu0 0.0
        %688 = vmatprep.subr.mxu0 0.0
        %689 = vmatpush2.msra.mxu0 0.0
        %690 = vmatprep.subr.mxu0 0.0
        %691 = vmatpush2.msra.mxu0 0.0
        %692 = vmatprep.subr.mxu0 0.0
        %693 = vmatpush2.msra.mxu0 0.0
        %694 = vmatprep.mubr.f32.mxu0 0.0
        %695 = vmatmul.mubr.f32.gmra.mxu0 %v623
        %v696 = vpop.f32.mrf.mxu0
        %v697 = vadd.f32 %v615, %v696
        %v698 = vpop.f32.mrf.mxu0
        %699 = vmatprep.mubr.f32.mxu0 0.0
        %700 = vmatmul.mubr.f32.gmra.mxu0 %v625
        %v701 = vpop.f32.mrf.mxu0
        %v702 = vadd.f32 %v620, %v701
        %v703 = vpop.f32.mrf.mxu0
        %704 = vdwg.mxu0
        %v706 = vlaneseq
        %v707 = vshrl.u32 %v706, 7
        %v708 = vsub.s32 0, %v707
        %v709 = vrot.slane %v520, %v708
        %v711 = vadd.f32 %v697, %v709
        %v712 = vadd.f32 %v702, %v709
        %v713 = vmax.f32 %v711, 0.0
        %v714 = vmax.f32 %v712, 0.0
        %v717 = vrot.slane %v713, 7
        %v718 = vrot.slane %v714, 7
        %v719 = vsel %vm526, %v717, %v718
        %v721 = vsel %vm526, 0.0, %v717
        %v723 = vrot.slane %v721, 1
        %v724 = vrot.slane %v719, 1
        %v725 = vsel %vm533, %v723, %v724
        %v726 = vrot.slane %v718, 1
        %v727 = vsel %vm533, %v724, %v726
        %vm728 = vcmask 64512
        %v729 = vsel %vm728, %v725, 0
        %v731 = vsel %vm728, %v727, 0
        %733 = vmatprep.subr.mxu0 0.0
        %734 = vmatpush1.msra.mxu0 0.0
        %735 = vmatprep.subr.mxu0 0.0
        %736 = vmatpush1.msra.mxu0 0.0
        %737 = vmatprep.subr.mxu0 0.0
        %738 = vmatpush1.msra.mxu0 0.0
        %739 = vmatprep.subr.mxu0 0.0
        %740 = vmatpush1.msra.mxu0 0.0
        %741 = vmatprep.subr.mxu0 0.0
        %742 = vmatpush1.msra.mxu0 0.0
        %743 = vmatprep.subr.mxu0 0.0
        %744 = vmatpush1.msra.mxu0 0.0
        %745 = vmatprep.subr.mxu0 0.0
        %746 = vmatpush1.msra.mxu0 0.0
        %747 = vmatprep.subr.mxu0 0.0
        %748 = vmatpush1.msra.mxu0 0.0
        %749 = vmatprep.subr.mxu0 0.0
        %750 = vmatpush1.msra.mxu0 0.0
        %751 = vmatprep.subr.mxu0 0.0
        %752 = vmatpush1.msra.mxu0 0.0
        %753 = vmatprep.subr.mxu0 0.0
        %754 = vmatpush1.msra.mxu0 0.0
        %755 = vmatprep.subr.mxu0 0.0
        %756 = vmatpush1.msra.mxu0 0.0
        %757 = vmatprep.subr.mxu0 0.0
        %758 = vmatpush1.msra.mxu0 0.0
        %759 = vmatprep.subr.mxu0 0.0
        %760 = vmatpush1.msra.mxu0 0.0
        %761 = vmatprep.subr.mxu0 0.0
        %762 = vmatpush1.msra.mxu0 0.0
        %763 = vmatprep.subr.mxu0 0.0
        %764 = vmatpush1.msra.mxu0 %v522
        %765 = vmatprep.subr.mxu0 0.0
        %766 = vmatpush2.msra.mxu0 0.0
        %767 = vmatprep.subr.mxu0 0.0
        %768 = vmatpush2.msra.mxu0 0.0
        %769 = vmatprep.subr.mxu0 0.0
        %770 = vmatpush2.msra.mxu0 0.0
        %771 = vmatprep.subr.mxu0 0.0
        %772 = vmatpush2.msra.mxu0 0.0
        %773 = vmatprep.subr.mxu0 0.0
        %774 = vmatpush2.msra.mxu0 0.0
        %775 = vmatprep.subr.mxu0 0.0
        %776 = vmatpush2.msra.mxu0 0.0
        %777 = vmatprep.subr.mxu0 0.0
        %778 = vmatpush2.msra.mxu0 0.0
        %779 = vmatprep.subr.mxu0 0.0
        %780 = vmatpush2.msra.mxu0 0.0
        %781 = vmatprep.subr.mxu0 0.0
        %782 = vmatpush2.msra.mxu0 0.0
        %783 = vmatprep.subr.mxu0 0.0
        %784 = vmatpush2.msra.mxu0 0.0
        %785 = vmatprep.subr.mxu0 0.0
        %786 = vmatpush2.msra.mxu0 0.0
        %787 = vmatprep.subr.mxu0 0.0
        %788 = vmatpush2.msra.mxu0 0.0
        %789 = vmatprep.subr.mxu0 0.0
        %790 = vmatpush2.msra.mxu0 0.0
        %791 = vmatprep.subr.mxu0 0.0
        %792 = vmatpush2.msra.mxu0 0.0
        %793 = vmatprep.subr.mxu0 0.0
        %794 = vmatpush2.msra.mxu0 0.0
        %795 = vmatprep.subr.mxu0 0.0
        %796 = vmatpush2.msra.mxu0 0.0
        %797 = vmatprep.mubr.f32.mxu0 0.0
        %798 = vmatmul.mubr.f32.gmra.mxu0 %v729
        %v799 = vpop.f32.mrf.mxu0
        %v800 = vadd.f32 0.0, %v799
        %v801 = vpop.f32.mrf.mxu0
        %802 = vmatprep.mubr.f32.mxu0 0.0
        %803 = vmatmul.mubr.f32.gmra.mxu0 %v731
        %v804 = vpop.f32.mrf.mxu0
        %v805 = vadd.f32 0.0, %v804
        %v806 = vpop.f32.mrf.mxu0
        %807 = vdwg.mxu0
        %v808 = vsel %vm728, %v721, 0
        %v810 = vsel %vm728, %v719, 0
        %812 = vmatprep.subr.mxu0 0.0
        %813 = vmatpush1.msra.mxu0 0.0
        %814 = vmatprep.subr.mxu0 0.0
        %815 = vmatpush1.msra.mxu0 0.0
        %816 = vmatprep.subr.mxu0 0.0
        %817 = vmatpush1.msra.mxu0 0.0
        %818 = vmatprep.subr.mxu0 0.0
        %819 = vmatpush1.msra.mxu0 0.0
        %820 = vmatprep.subr.mxu0 0.0
        %821 = vmatpush1.msra.mxu0 0.0
        %822 = vmatprep.subr.mxu0 0.0
        %823 = vmatpush1.msra.mxu0 0.0
        %824 = vmatprep.subr.mxu0 0.0
        %825 = vmatpush1.msra.mxu0 0.0
        %826 = vmatprep.subr.mxu0 0.0
        %827 = vmatpush1.msra.mxu0 0.0
        %828 = vmatprep.subr.mxu0 0.0
        %829 = vmatpush1.msra.mxu0 0.0
        %830 = vmatprep.subr.mxu0 0.0
        %831 = vmatpush1.msra.mxu0 0.0
        %832 = vmatprep.subr.mxu0 0.0
        %833 = vmatpush1.msra.mxu0 0.0
        %834 = vmatprep.subr.mxu0 0.0
        %835 = vmatpush1.msra.mxu0 0.0
        %836 = vmatprep.subr.mxu0 0.0
        %837 = vmatpush1.msra.mxu0 0.0
        %838 = vmatprep.subr.mxu0 0.0
        %839 = vmatpush1.msra.mxu0 0.0
        %840 = vmatprep.subr.mxu0 0.0
        %841 = vmatpush1.msra.mxu0 0.0
        %842 = vmatprep.subr.mxu0 0.0
        %843 = vmatpush1.msra.mxu0 %v521
        %844 = vmatprep.subr.mxu0 0.0
        %845 = vmatpush2.msra.mxu0 0.0
        %846 = vmatprep.subr.mxu0 0.0
        %847 = vmatpush2.msra.mxu0 0.0
        %848 = vmatprep.subr.mxu0 0.0
        %849 = vmatpush2.msra.mxu0 0.0
        %850 = vmatprep.subr.mxu0 0.0
        %851 = vmatpush2.msra.mxu0 0.0
        %852 = vmatprep.subr.mxu0 0.0
        %853 = vmatpush2.msra.mxu0 0.0
        %854 = vmatprep.subr.mxu0 0.0
        %855 = vmatpush2.msra.mxu0 0.0
        %856 = vmatprep.subr.mxu0 0.0
        %857 = vmatpush2.msra.mxu0 0.0
        %858 = vmatprep.subr.mxu0 0.0
        %859 = vmatpush2.msra.mxu0 0.0
        %860 = vmatprep.subr.mxu0 0.0
        %861 = vmatpush2.msra.mxu0 0.0
        %862 = vmatprep.subr.mxu0 0.0
        %863 = vmatpush2.msra.mxu0 0.0
        %864 = vmatprep.subr.mxu0 0.0
        %865 = vmatpush2.msra.mxu0 0.0
        %866 = vmatprep.subr.mxu0 0.0
        %867 = vmatpush2.msra.mxu0 0.0
        %868 = vmatprep.subr.mxu0 0.0
        %869 = vmatpush2.msra.mxu0 0.0
        %870 = vmatprep.subr.mxu0 0.0
        %871 = vmatpush2.msra.mxu0 0.0
        %872 = vmatprep.subr.mxu0 0.0
        %873 = vmatpush2.msra.mxu0 0.0
        %874 = vmatprep.subr.mxu0 0.0
        %875 = vmatpush2.msra.mxu0 0.0
        %876 = vmatprep.mubr.f32.mxu0 0.0
        %877 = vmatmul.mubr.f32.gmra.mxu0 %v808
        %v878 = vpop.f32.mrf.mxu0
        %v879 = vadd.f32 %v800, %v878
        %v880 = vpop.f32.mrf.mxu0
        %881 = vmatprep.mubr.f32.mxu0 0.0
        %882 = vmatmul.mubr.f32.gmra.mxu0 %v810
        %v883 = vpop.f32.mrf.mxu0
        %v884 = vadd.f32 %v805, %v883
        %v885 = vpop.f32.mrf.mxu0
        %886 = vdwg.mxu0
        %v888 = vlaneseq
        %v889 = vshrl.u32 %v888, 7
        %v890 = vsub.s32 0, %v889
        %v891 = vrot.slane %v523, %v890
        %v893 = vadd.f32 %v879, %v891
        %v894 = vadd.f32 %v884, %v891
        %v895 = vmax.f32 %v893, 0.0
        %v896 = vmax.f32 %v894, 0.0
        %v897 = vld [vmem:[#allocation8] sm:$0xf]
        %v898 = vld [vmem:[#allocation10] sm:$0x1]
        %v900 = vlaneseq
        %v901 = vshrl.u32 %v900, 7
        %v902 = vsub.s32 0, %v901
        %v903 = vrot.slane %v898, %v902
        %v905 = vsel %vm539, %v516, 0
        %v907 = vsel %vm539, %v517, 0
        %v910 = vsel %vm544, %v897, 0
        %912 = vmatprep.subr.mxu0 0.0
        %913 = vmatpush1.msra.mxu0 0.0
        %914 = vmatprep.subr.mxu0 0.0
        %915 = vmatpush1.msra.mxu0 0.0
        %916 = vmatprep.subr.mxu0 0.0
        %917 = vmatpush1.msra.mxu0 0.0
        %918 = vmatprep.subr.mxu0 0.0
        %919 = vmatpush1.msra.mxu0 0.0
        %920 = vmatprep.subr.mxu0 0.0
        %921 = vmatpush1.msra.mxu0 0.0
        %922 = vmatprep.subr.mxu0 0.0
        %923 = vmatpush1.msra.mxu0 0.0
        %924 = vmatprep.subr.mxu0 0.0
        %925 = vmatpush1.msra.mxu0 0.0
        %926 = vmatprep.subr.mxu0 0.0
        %927 = vmatpush1.msra.mxu0 0.0
        %928 = vmatprep.subr.mxu0 0.0
        %929 = vmatpush1.msra.mxu0 0.0
        %930 = vmatprep.subr.mxu0 0.0
        %931 = vmatpush1.msra.mxu0 0.0
        %932 = vmatprep.subr.mxu0 0.0
        %933 = vmatpush1.msra.mxu0 0.0
        %934 = vmatprep.subr.mxu0 0.0
        %935 = vmatpush1.msra.mxu0 0.0
        %936 = vmatprep.subr.mxu0 0.0
        %937 = vmatpush1.msra.mxu0 0.0
        %938 = vmatprep.subr.mxu0 0.0
        %939 = vmatpush1.msra.mxu0 0.0
        %940 = vmatprep.subr.mxu0 0.0
        %941 = vmatpush1.msra.mxu0 0.0
        %942 = vmatprep.subr.mxu0 0.0
        %943 = vmatpush1.msra.mxu0 %v910
        %944 = vmatprep.subr.mxu0 0.0
        %945 = vmatpush2.msra.mxu0 0.0
        %946 = vmatprep.subr.mxu0 0.0
        %947 = vmatpush2.msra.mxu0 0.0
        %948 = vmatprep.subr.mxu0 0.0
        %949 = vmatpush2.msra.mxu0 0.0
        %950 = vmatprep.subr.mxu0 0.0
        %951 = vmatpush2.msra.mxu0 0.0
        %952 = vmatprep.subr.mxu0 0.0
        %953 = vmatpush2.msra.mxu0 0.0
        %954 = vmatprep.subr.mxu0 0.0
        %955 = vmatpush2.msra.mxu0 0.0
        %956 = vmatprep.subr.mxu0 0.0
        %957 = vmatpush2.msra.mxu0 0.0
        %958 = vmatprep.subr.mxu0 0.0
        %959 = vmatpush2.msra.mxu0 0.0
        %960 = vmatprep.subr.mxu0 0.0
        %961 = vmatpush2.msra.mxu0 0.0
        %962 = vmatprep.subr.mxu0 0.0
        %963 = vmatpush2.msra.mxu0 0.0
        %964 = vmatprep.subr.mxu0 0.0
        %965 = vmatpush2.msra.mxu0 0.0
        %966 = vmatprep.subr.mxu0 0.0
        %967 = vmatpush2.msra.mxu0 0.0
        %968 = vmatprep.subr.mxu0 0.0
        %969 = vmatpush2.msra.mxu0 0.0
        %970 = vmatprep.subr.mxu0 0.0
        %971 = vmatpush2.msra.mxu0 0.0
        %972 = vmatprep.subr.mxu0 0.0
        %973 = vmatpush2.msra.mxu0 0.0
        %974 = vmatprep.subr.mxu0 0.0
        %975 = vmatpush2.msra.mxu0 0.0
        %976 = vmatprep.mubr.f32.mxu0 0.0
        %977 = vmatmul.mubr.f32.gmra.mxu0 %v905
        %v978 = vpop.f32.mrf.mxu0
        %v979 = vadd.f32 %v903, %v978
        %v980 = vpop.f32.mrf.mxu0
        %981 = vmatprep.mubr.f32.mxu0 0.0
        %982 = vmatmul.mubr.f32.gmra.mxu0 %v907
        %v983 = vpop.f32.mrf.mxu0
        %v984 = vadd.f32 %v903, %v983
        %v985 = vpop.f32.mrf.mxu0
        %986 = vdwg.mxu0
        %v987 = vadd.f32 %v895, %v979
        %v988 = vadd.f32 %v896, %v984
        %v989 = vmax.f32 %v987, 0.0
        %v990 = vmax.f32 %v988, 0.0
        %v991 = vld [vmem:[%s7] sm:$0xff]
        %v992 = vld [vmem:[%s7 + $0x8] sm:$0xff]
        %v993 = vld [vmem:[#allocation11] sm:$0x1]
        %v994 = vld [vmem:[%s9] sm:$0xff]
        %v995 = vld [vmem:[%s9 + $0x8] sm:$0xff]
        %v996 = vld [vmem:[%s10] sm:$0x1]
        %vm999 = vcmask 1041408
        %v1000 = vrot.slane %v989, 6
        %v1001 = vrot.slane %v990, 6
        %v1002 = vsel %vm999, %v1000, %v1001
        %v1004 = vsel %vm999, 0.0, %v1000
        %vm1006 = vcmask 1045504
        %v1007 = vrot.slane %v1004, 2
        %v1008 = vrot.slane %v1002, 2
        %v1009 = vsel %vm1006, %v1007, %v1008
        %v1010 = vrot.slane %v1001, 2
        %v1011 = vsel %vm1006, %v1008, %v1010
        %v1012 = vsel %vm728, %v1009, 0
        %v1014 = vsel %vm728, %v1011, 0
        %1016 = vmatprep.subr.mxu0 0.0
        %1017 = vmatpush1.msra.mxu0 0.0
        %1018 = vmatprep.subr.mxu0 0.0
        %1019 = vmatpush1.msra.mxu0 0.0
        %1020 = vmatprep.subr.mxu0 0.0
        %1021 = vmatpush1.msra.mxu0 0.0
        %1022 = vmatprep.subr.mxu0 0.0
        %1023 = vmatpush1.msra.mxu0 0.0
        %1024 = vmatprep.subr.mxu0 0.0
        %1025 = vmatpush1.msra.mxu0 0.0
        %1026 = vmatprep.subr.mxu0 0.0
        %1027 = vmatpush1.msra.mxu0 0.0
        %1028 = vmatprep.subr.mxu0 0.0
        %1029 = vmatpush1.msra.mxu0 0.0
        %1030 = vmatprep.subr.mxu0 0.0
        %1031 = vmatpush1.msra.mxu0 0.0
        %1032 = vmatprep.subr.mxu0 0.0
        %1033 = vmatpush1.msra.mxu0 0.0
        %1034 = vmatprep.subr.mxu0 0.0
        %1035 = vmatpush1.msra.mxu0 0.0
        %1036 = vmatprep.subr.mxu0 0.0
        %1037 = vmatpush1.msra.mxu0 0.0
        %1038 = vmatprep.subr.mxu0 0.0
        %1039 = vmatpush1.msra.mxu0 0.0
        %1040 = vmatprep.subr.mxu0 0.0
        %1041 = vmatpush1.msra.mxu0 0.0
        %1042 = vmatprep.subr.mxu0 0.0
        %1043 = vmatpush1.msra.mxu0 0.0
        %1044 = vmatprep.subr.mxu0 0.0
        %1045 = vmatpush1.msra.mxu0 0.0
        %1046 = vmatprep.subr.mxu0 0.0
        %1047 = vmatpush1.msra.mxu0 %v992
        %1048 = vmatprep.subr.mxu0 0.0
        %1049 = vmatpush2.msra.mxu0 0.0
        %1050 = vmatprep.subr.mxu0 0.0
        %1051 = vmatpush2.msra.mxu0 0.0
        %1052 = vmatprep.subr.mxu0 0.0
        %1053 = vmatpush2.msra.mxu0 0.0
        %1054 = vmatprep.subr.mxu0 0.0
        %1055 = vmatpush2.msra.mxu0 0.0
        %1056 = vmatprep.subr.mxu0 0.0
        %1057 = vmatpush2.msra.mxu0 0.0
        %1058 = vmatprep.subr.mxu0 0.0
        %1059 = vmatpush2.msra.mxu0 0.0
        %1060 = vmatprep.subr.mxu0 0.0
        %1061 = vmatpush2.msra.mxu0 0.0
        %1062 = vmatprep.subr.mxu0 0.0
        %1063 = vmatpush2.msra.mxu0 0.0
        %1064 = vmatprep.subr.mxu0 0.0
        %1065 = vmatpush2.msra.mxu0 0.0
        %1066 = vmatprep.subr.mxu0 0.0
        %1067 = vmatpush2.msra.mxu0 0.0
        %1068 = vmatprep.subr.mxu0 0.0
        %1069 = vmatpush2.msra.mxu0 0.0
        %1070 = vmatprep.subr.mxu0 0.0
        %1071 = vmatpush2.msra.mxu0 0.0
        %1072 = vmatprep.subr.mxu0 0.0
        %1073 = vmatpush2.msra.mxu0 0.0
        %1074 = vmatprep.subr.mxu0 0.0
        %1075 = vmatpush2.msra.mxu0 0.0
        %1076 = vmatprep.subr.mxu0 0.0
        %1077 = vmatpush2.msra.mxu0 0.0
        %1078 = vmatprep.subr.mxu0 0.0
        %1079 = vmatpush2.msra.mxu0 0.0
        %1080 = vmatprep.mubr.f32.mxu0 0.0
        %1081 = vmatmul.mubr.f32.gmra.mxu0 %v1012
        %v1082 = vpop.f32.mrf.mxu0
        %v1083 = vadd.f32 0.0, %v1082
        %v1084 = vpop.f32.mrf.mxu0
        %1085 = vmatprep.mubr.f32.mxu0 0.0
        %1086 = vmatmul.mubr.f32.gmra.mxu0 %v1014
        %v1087 = vpop.f32.mrf.mxu0
        %v1088 = vadd.f32 0.0, %v1087
        %v1089 = vpop.f32.mrf.mxu0
        %1090 = vdwg.mxu0
        %v1091 = vsel %vm728, %v1004, 0
        %v1093 = vsel %vm728, %v1002, 0
        %1095 = vmatprep.subr.mxu0 0.0
        %1096 = vmatpush1.msra.mxu0 0.0
        %1097 = vmatprep.subr.mxu0 0.0
        %1098 = vmatpush1.msra.mxu0 0.0
        %1099 = vmatprep.subr.mxu0 0.0
        %1100 = vmatpush1.msra.mxu0 0.0
        %1101 = vmatprep.subr.mxu0 0.0
        %1102 = vmatpush1.msra.mxu0 0.0
        %1103 = vmatprep.subr.mxu0 0.0
        %1104 = vmatpush1.msra.mxu0 0.0
        %1105 = vmatprep.subr.mxu0 0.0
        %1106 = vmatpush1.msra.mxu0 0.0
        %1107 = vmatprep.subr.mxu0 0.0
        %1108 = vmatpush1.msra.mxu0 0.0
        %1109 = vmatprep.subr.mxu0 0.0
        %1110 = vmatpush1.msra.mxu0 0.0
        %1111 = vmatprep.subr.mxu0 0.0
        %1112 = vmatpush1.msra.mxu0 0.0
        %1113 = vmatprep.subr.mxu0 0.0
        %1114 = vmatpush1.msra.mxu0 0.0
        %1115 = vmatprep.subr.mxu0 0.0
        %1116 = vmatpush1.msra.mxu0 0.0
        %1117 = vmatprep.subr.mxu0 0.0
        %1118 = vmatpush1.msra.mxu0 0.0
        %1119 = vmatprep.subr.mxu0 0.0
        %1120 = vmatpush1.msra.mxu0 0.0
        %1121 = vmatprep.subr.mxu0 0.0
        %1122 = vmatpush1.msra.mxu0 0.0
        %1123 = vmatprep.subr.mxu0 0.0
        %1124 = vmatpush1.msra.mxu0 0.0
        %1125 = vmatprep.subr.mxu0 0.0
        %1126 = vmatpush1.msra.mxu0 %v991
        %1127 = vmatprep.subr.mxu0 0.0
        %1128 = vmatpush2.msra.mxu0 0.0
        %1129 = vmatprep.subr.mxu0 0.0
        %1130 = vmatpush2.msra.mxu0 0.0
        %1131 = vmatprep.subr.mxu0 0.0
        %1132 = vmatpush2.msra.mxu0 0.0
        %1133 = vmatprep.subr.mxu0 0.0
        %1134 = vmatpush2.msra.mxu0 0.0
        %1135 = vmatprep.subr.mxu0 0.0
        %1136 = vmatpush2.msra.mxu0 0.0
        %1137 = vmatprep.subr.mxu0 0.0
        %1138 = vmatpush2.msra.mxu0 0.0
        %1139 = vmatprep.subr.mxu0 0.0
        %1140 = vmatpush2.msra.mxu0 0.0
        %1141 = vmatprep.subr.mxu0 0.0
        %1142 = vmatpush2.msra.mxu0 0.0
        %1143 = vmatprep.subr.mxu0 0.0
        %1144 = vmatpush2.msra.mxu0 0.0
        %1145 = vmatprep.subr.mxu0 0.0
        %1146 = vmatpush2.msra.mxu0 0.0
        %1147 = vmatprep.subr.mxu0 0.0
        %1148 = vmatpush2.msra.mxu0 0.0
        %1149 = vmatprep.subr.mxu0 0.0
        %1150 = vmatpush2.msra.mxu0 0.0
        %1151 = vmatprep.subr.mxu0 0.0
        %1152 = vmatpush2.msra.mxu0 0.0
        %1153 = vmatprep.subr.mxu0 0.0
        %1154 = vmatpush2.msra.mxu0 0.0
        %1155 = vmatprep.subr.mxu0 0.0
        %1156 = vmatpush2.msra.mxu0 0.0
        %1157 = vmatprep.subr.mxu0 0.0
        %1158 = vmatpush2.msra.mxu0 0.0
        %1159 = vmatprep.mubr.f32.mxu0 0.0
        %1160 = vmatmul.mubr.f32.gmra.mxu0 %v1091
        %v1161 = vpop.f32.mrf.mxu0
        %v1162 = vadd.f32 %v1083, %v1161
        %v1163 = vpop.f32.mrf.mxu0
        %1164 = vmatprep.mubr.f32.mxu0 0.0
        %1165 = vmatmul.mubr.f32.gmra.mxu0 %v1093
        %v1166 = vpop.f32.mrf.mxu0
        %v1167 = vadd.f32 %v1088, %v1166
        %v1168 = vpop.f32.mrf.mxu0
        %1169 = vdwg.mxu0
        %v1171 = vlaneseq
        %v1172 = vshrl.u32 %v1171, 7
        %v1173 = vsub.s32 0, %v1172
        %v1174 = vrot.slane %v993, %v1173
        %v1176 = vadd.f32 %v1162, %v1174
        %v1177 = vadd.f32 %v1167, %v1174
        %v1178 = vmax.f32 %v1176, 0.0
        %v1179 = vmax.f32 %v1177, 0.0
        %v1182 = vrot.slane %v1178, 6
        %v1183 = vrot.slane %v1179, 6
        %v1184 = vsel %vm999, %v1182, %v1183
        %v1186 = vsel %vm999, 0.0, %v1182
        %v1188 = vrot.slane %v1186, 2
        %v1189 = vrot.slane %v1184, 2
        %v1190 = vsel %vm1006, %v1188, %v1189
        %v1191 = vrot.slane %v1183, 2
        %v1192 = vsel %vm1006, %v1189, %v1191
        %v1193 = vsel %vm728, %v1190, 0
        %v1195 = vsel %vm728, %v1192, 0
        %1197 = vmatprep.subr.mxu0 0.0
        %1198 = vmatpush1.msra.mxu0 0.0
        %1199 = vmatprep.subr.mxu0 0.0
        %1200 = vmatpush1.msra.mxu0 0.0
        %1201 = vmatprep.subr.mxu0 0.0
        %1202 = vmatpush1.msra.mxu0 0.0
        %1203 = vmatprep.subr.mxu0 0.0
        %1204 = vmatpush1.msra.mxu0 0.0
        %1205 = vmatprep.subr.mxu0 0.0
        %1206 = vmatpush1.msra.mxu0 0.0
        %1207 = vmatprep.subr.mxu0 0.0
        %1208 = vmatpush1.msra.mxu0 0.0
        %1209 = vmatprep.subr.mxu0 0.0
        %1210 = vmatpush1.msra.mxu0 0.0
        %1211 = vmatprep.subr.mxu0 0.0
        %1212 = vmatpush1.msra.mxu0 0.0
        %1213 = vmatprep.subr.mxu0 0.0
        %1214 = vmatpush1.msra.mxu0 0.0
        %1215 = vmatprep.subr.mxu0 0.0
        %1216 = vmatpush1.msra.mxu0 0.0
        %1217 = vmatprep.subr.mxu0 0.0
        %1218 = vmatpush1.msra.mxu0 0.0
        %1219 = vmatprep.subr.mxu0 0.0
        %1220 = vmatpush1.msra.mxu0 0.0
        %1221 = vmatprep.subr.mxu0 0.0
        %1222 = vmatpush1.msra.mxu0 0.0
        %1223 = vmatprep.subr.mxu0 0.0
        %1224 = vmatpush1.msra.mxu0 0.0
        %1225 = vmatprep.subr.mxu0 0.0
        %1226 = vmatpush1.msra.mxu0 0.0
        %1227 = vmatprep.subr.mxu0 0.0
        %1228 = vmatpush1.msra.mxu0 %v995
        %1229 = vmatprep.subr.mxu0 0.0
        %1230 = vmatpush2.msra.mxu0 0.0
        %1231 = vmatprep.subr.mxu0 0.0
        %1232 = vmatpush2.msra.mxu0 0.0
        %1233 = vmatprep.subr.mxu0 0.0
        %1234 = vmatpush2.msra.mxu0 0.0
        %1235 = vmatprep.subr.mxu0 0.0
        %1236 = vmatpush2.msra.mxu0 0.0
        %1237 = vmatprep.subr.mxu0 0.0
        %1238 = vmatpush2.msra.mxu0 0.0
        %1239 = vmatprep.subr.mxu0 0.0
        %1240 = vmatpush2.msra.mxu0 0.0
        %1241 = vmatprep.subr.mxu0 0.0
        %1242 = vmatpush2.msra.mxu0 0.0
        %1243 = vmatprep.subr.mxu0 0.0
        %1244 = vmatpush2.msra.mxu0 0.0
        %1245 = vmatprep.subr.mxu0 0.0
        %1246 = vmatpush2.msra.mxu0 0.0
        %1247 = vmatprep.subr.mxu0 0.0
        %1248 = vmatpush2.msra.mxu0 0.0
        %1249 = vmatprep.subr.mxu0 0.0
        %1250 = vmatpush2.msra.mxu0 0.0
        %1251 = vmatprep.subr.mxu0 0.0
        %1252 = vmatpush2.msra.mxu0 0.0
        %1253 = vmatprep.subr.mxu0 0.0
        %1254 = vmatpush2.msra.mxu0 0.0
        %1255 = vmatprep.subr.mxu0 0.0
        %1256 = vmatpush2.msra.mxu0 0.0
        %1257 = vmatprep.subr.mxu0 0.0
        %1258 = vmatpush2.msra.mxu0 0.0
        %1259 = vmatprep.subr.mxu0 0.0
        %1260 = vmatpush2.msra.mxu0 0.0
        %1261 = vmatprep.mubr.f32.mxu0 0.0
        %1262 = vmatmul.mubr.f32.gmra.mxu0 %v1193
        %v1263 = vpop.f32.mrf.mxu0
        %v1264 = vpop.f32.mrf.mxu0
        %1265 = vmatprep.mubr.f32.mxu0 0.0
        %1266 = vmatmul.mubr.f32.gmra.mxu0 %v1195
        %v1267 = vpop.f32.mrf.mxu0
        %v1268 = vadd.f32 0.0, %v1267
        %v1269 = vpop.f32.mrf.mxu0
        %1270 = vdwg.mxu0
        %v1271 = vsel %vm728, %v1186, 0
        %v1273 = vsel %vm728, %v1184, 0
        %1275 = vmatprep.subr.mxu0 0.0
        %1276 = vmatpush1.msra.mxu0 0.0
        %1277 = vmatprep.subr.mxu0 0.0
        %1278 = vmatpush1.msra.mxu0 0.0
        %1279 = vmatprep.subr.mxu0 0.0
        %1280 = vmatpush1.msra.mxu0 0.0
        %1281 = vmatprep.subr.mxu0 0.0
        %1282 = vmatpush1.msra.mxu0 0.0
        %1283 = vmatprep.subr.mxu0 0.0
        %1284 = vmatpush1.msra.mxu0 0.0
        %1285 = vmatprep.subr.mxu0 0.0
        %1286 = vmatpush1.msra.mxu0 0.0
        %1287 = vmatprep.subr.mxu0 0.0
        %1288 = vmatpush1.msra.mxu0 0.0
        %1289 = vmatprep.subr.mxu0 0.0
        %1290 = vmatpush1.msra.mxu0 0.0
        %1291 = vmatprep.subr.mxu0 0.0
        %1292 = vmatpush1.msra.mxu0 0.0
        %1293 = vmatprep.subr.mxu0 0.0
        %1294 = vmatpush1.msra.mxu0 0.0
        %1295 = vmatprep.subr.mxu0 0.0
        %1296 = vmatpush1.msra.mxu0 0.0
        %1297 = vmatprep.subr.mxu0 0.0
        %1298 = vmatpush1.msra.mxu0 0.0
        %1299 = vmatprep.subr.mxu0 0.0
        %1300 = vmatpush1.msra.mxu0 0.0
        %1301 = vmatprep.subr.mxu0 0.0
        %1302 = vmatpush1.msra.mxu0 0.0
        %1303 = vmatprep.subr.mxu0 0.0
        %1304 = vmatpush1.msra.mxu0 0.0
        %1305 = vmatprep.subr.mxu0 0.0
        %1306 = vmatpush1.msra.mxu0 %v994
        %1307 = vmatprep.subr.mxu0 0.0
        %1308 = vmatpush2.msra.mxu0 0.0
        %1309 = vmatprep.subr.mxu0 0.0
        %1310 = vmatpush2.msra.mxu0 0.0
        %1311 = vmatprep.subr.mxu0 0.0
        %1312 = vmatpush2.msra.mxu0 0.0
        %1313 = vmatprep.subr.mxu0 0.0
        %1314 = vmatpush2.msra.mxu0 0.0
        %1315 = vmatprep.subr.mxu0 0.0
        %1316 = vmatpush2.msra.mxu0 0.0
        %1317 = vmatprep.subr.mxu0 0.0
        %1318 = vmatpush2.msra.mxu0 0.0
        %1319 = vmatprep.subr.mxu0 0.0
        %1320 = vmatpush2.msra.mxu0 0.0
        %1321 = vmatprep.subr.mxu0 0.0
        %1322 = vmatpush2.msra.mxu0 0.0
        %1323 = vmatprep.subr.mxu0 0.0
        %1324 = vmatpush2.msra.mxu0 0.0
        %1325 = vmatprep.subr.mxu0 0.0
        %1326 = vmatpush2.msra.mxu0 0.0
        %1327 = vmatprep.subr.mxu0 0.0
        %1328 = vmatpush2.msra.mxu0 0.0
        %1329 = vmatprep.subr.mxu0 0.0
        %1330 = vmatpush2.msra.mxu0 0.0
        %1331 = vmatprep.subr.mxu0 0.0
        %1332 = vmatpush2.msra.mxu0 0.0
        %1333 = vmatprep.subr.mxu0 0.0
        %1334 = vmatpush2.msra.mxu0 0.0
        %1335 = vmatprep.subr.mxu0 0.0
        %1336 = vmatpush2.msra.mxu0 0.0
        %1337 = vmatprep.subr.mxu0 0.0
        %1338 = vmatpush2.msra.mxu0 0.0
        %1339 = vmatprep.mubr.f32.mxu0 0.0
        %1340 = vmatmul.mubr.f32.gmra.mxu0 %v1271
        %v1341 = vpop.f32.mrf.mxu0
        %v1342 = vpop.f32.mrf.mxu0
        %1343 = vmatprep.mubr.f32.mxu0 0.0
        %1344 = vmatmul.mubr.f32.gmra.mxu0 %v1273
        %v1345 = vpop.f32.mrf.mxu0
        %v1346 = vadd.f32 %v1268, %v1345
        %v1347 = vpop.f32.mrf.mxu0
        %1348 = vdwg.mxu0
        %v1350 = vlaneseq
        %v1351 = vshrl.u32 %v1350, 7
        %v1352 = vsub.s32 0, %v1351
        %v1353 = vrot.slane %v996, %v1352
        %v1355 = vadd.f32 %v1346, %v1353
        %v1356 = vmax.f32 %v1355, 0.0
        %v1357 = vadd.f32 %v1356, %v990
        %v1358 = vmax.f32 %v1357, 0.0
        %v1359 = vld [vmem:[%s11] sm:$0xff]
        %v1360 = vld [vmem:[%s12] sm:$0x1]
        %v1362 = vrot.slane %v1358, 7
        %v1363 = vsel %vm728, %v1362, 0
        %1365 = vmatprep.subr.mxu0 0.0
        %1366 = vmatpush1.msra.mxu0 0.0
        %1367 = vmatprep.subr.mxu0 0.0
        %1368 = vmatpush1.msra.mxu0 0.0
        %1369 = vmatprep.subr.mxu0 0.0
        %1370 = vmatpush1.msra.mxu0 0.0
        %1371 = vmatprep.subr.mxu0 0.0
        %1372 = vmatpush1.msra.mxu0 0.0
        %1373 = vmatprep.subr.mxu0 0.0
        %1374 = vmatpush1.msra.mxu0 0.0
        %1375 = vmatprep.subr.mxu0 0.0
        %1376 = vmatpush1.msra.mxu0 0.0
        %1377 = vmatprep.subr.mxu0 0.0
        %1378 = vmatpush1.msra.mxu0 0.0
        %1379 = vmatprep.subr.mxu0 0.0
        %1380 = vmatpush1.msra.mxu0 0.0
        %1381 = vmatprep.subr.mxu0 0.0
        %1382 = vmatpush1.msra.mxu0 0.0
        %1383 = vmatprep.subr.mxu0 0.0
        %1384 = vmatpush1.msra.mxu0 0.0
        %1385 = vmatprep.subr.mxu0 0.0
        %1386 = vmatpush1.msra.mxu0 0.0
        %1387 = vmatprep.subr.mxu0 0.0
        %1388 = vmatpush1.msra.mxu0 0.0
        %1389 = vmatprep.subr.mxu0 0.0
        %1390 = vmatpush1.msra.mxu0 0.0
        %1391 = vmatprep.subr.mxu0 0.0
        %1392 = vmatpush1.msra.mxu0 0.0
        %1393 = vmatprep.subr.mxu0 0.0
        %1394 = vmatpush1.msra.mxu0 0.0
        %1395 = vmatprep.subr.mxu0 0.0
        %1396 = vmatpush1.msra.mxu0 %v1359
        %1397 = vmatprep.subr.mxu0 0.0
        %1398 = vmatpush2.msra.mxu0 0.0
        %1399 = vmatprep.subr.mxu0 0.0
        %1400 = vmatpush2.msra.mxu0 0.0
        %1401 = vmatprep.subr.mxu0 0.0
        %1402 = vmatpush2.msra.mxu0 0.0
        %1403 = vmatprep.subr.mxu0 0.0
        %1404 = vmatpush2.msra.mxu0 0.0
        %1405 = vmatprep.subr.mxu0 0.0
        %1406 = vmatpush2.msra.mxu0 0.0
        %1407 = vmatprep.subr.mxu0 0.0
        %1408 = vmatpush2.msra.mxu0 0.0
        %1409 = vmatprep.subr.mxu0 0.0
        %1410 = vmatpush2.msra.mxu0 0.0
        %1411 = vmatprep.subr.mxu0 0.0
        %1412 = vmatpush2.msra.mxu0 0.0
        %1413 = vmatprep.subr.mxu0 0.0
        %1414 = vmatpush2.msra.mxu0 0.0
        %1415 = vmatprep.subr.mxu0 0.0
        %1416 = vmatpush2.msra.mxu0 0.0
        %1417 = vmatprep.subr.mxu0 0.0
        %1418 = vmatpush2.msra.mxu0 0.0
        %1419 = vmatprep.subr.mxu0 0.0
        %1420 = vmatpush2.msra.mxu0 0.0
        %1421 = vmatprep.subr.mxu0 0.0
        %1422 = vmatpush2.msra.mxu0 0.0
        %1423 = vmatprep.subr.mxu0 0.0
        %1424 = vmatpush2.msra.mxu0 0.0
        %1425 = vmatprep.subr.mxu0 0.0
        %1426 = vmatpush2.msra.mxu0 0.0
        %1427 = vmatprep.subr.mxu0 0.0
        %1428 = vmatpush2.msra.mxu0 0.0
        %1429 = vmatprep.mubr.f32.mxu0 0.0
        %1430 = vmatmul.mubr.f32.gmra.mxu0 %v1363
        %v1431 = vpop.f32.mrf.mxu0
        %v1432 = vadd.f32 %v1360, %v1431
        %v1433 = vpop.f32.mrf.mxu0
        %1434 = vdwg.mxu0
        %vm1435 = vcmask 32768
        %1436 = vst.msk [vmem:[%s510] sm:$0x1] %vm1435, %v1432
        %s1437 = sand.u32 %s317, 1
        %s1438 = scalar_lea.sflag [#allocation4], %s1437
        %s1439 = sand.u32 %s317, 1
        %s1440 = scalar_lea.vmem [#allocation13], %s1439
        // Predicated region
        $region97: #{tpu_custom_call.1} parent=71 // pred_check
          %p1441 = pneg %p327
        $region98: #{tpu_custom_call.1} parent=71 // pred_check_branch
          %1443 = sbr.rel (%p1441) target = $region100
        $region99: #{tpu_custom_call.1} parent=71 // pred_region
          %s1445 = ssub.s32 16, 16
          %1446 = vsyncadd %s1438, %s1445
          %s1447 = smul.addr %s31, 16
          %s1448 = scalar_lea.hbm %s13, %s1447
          %s1450 = sshll.u32 %s1440, 4
          %s1451 = int_to_ptr.vmem [resolvable:$true] %s1450
          %1453 = dma.vmem_to_hbm [thread:$0]  %s1451, 16, %s1448, %s1438
        $region100: #{tpu_custom_call.1} parent=71 // pred_fallthru
          _
      $region72: #{tpu_custom_call.1} parent=5 // pred_fallthru
        _
      %p1454 = scmp.le.s32.totalorder 2, %s26
      // Predicated region
      $region101: #{tpu_custom_call.1} parent=5 // pred_check
        %p1455 = pneg %p1454
      $region102: #{tpu_custom_call.1} parent=5 // pred_check_branch
        %1457 = sbr.rel (%p1455) target = $region104
      $region103: #{tpu_custom_call.1} parent=5 // pred_region
        %s1458 = ssub.s32 %s26, 2
        // Predicated region
        $region105: #{tpu_custom_call.1} parent=103 // pred_check
          %p1459 = pneg %p333
        $region106: #{tpu_custom_call.1} parent=103 // pred_check_branch
          %1461 = sbr.rel (%p1459) target = $region108
        $region107: #{tpu_custom_call.1} parent=103 // pred_region
          %s1462 = sand.u32 %s318, 1
          %s1463 = scalar_lea.sflag [#allocation4], %s1462
          %s1464 = sand.u32 %s318, 1
          %s1465 = scalar_lea.vmem [#allocation13], %s1464
          %1466 = dma.done %s1463, 16
        $region108: #{tpu_custom_call.1} parent=103 // pred_fallthru
          _
      $region104: #{tpu_custom_call.1} parent=5 // pred_fallthru
        _
    $region6: #{tpu_custom_call.1} parent=1 // loop_footer
      %s30 = sadd.s32 1, %s26
    $region7: #{tpu_custom_call.1} parent=1 // loop_footer_branch
      %25 = sbr.rel target = $region3
    $region8: #{tpu_custom_call.1} parent=1 // loop_exit
      _
    %1467 = vsyncpa [#allocation3], 1
    %s1468 = scalar_lea.sflag [#allocation3], 1
    %1469 = vsyncpa %s1468, 1
    %1470 = vsyncpa [#allocation6], 1
    %1471 = vsyncpa [#allocation9], 1
    %1472 = vsyncpa [#allocation12], 1
    %1473 = vsyncpa [#allocation4], 1
    %s1474 = scalar_lea.sflag [#allocation4], 1
    %1475 = vsyncpa %s1474, 1

</llo_original>
